<compile_context>
chip_gen: v7x
topology: tpu7x:2x2x1
jax: 0.10.0
libtpu: 0.0.40
codegen_flags: <defaults>
</compile_context>

<pallas_src>
import numpy as np
import jax
import jax.numpy as jnp
from jax.experimental import pallas as pl
from jax.experimental.pallas import tpu as pltpu


C0, C1, C2 = 16, 6, 6          # fixed channel counts of the PyTorch module


def _cdiv(a, b):
    return -(-a // b)


def _round_up(a, b):
    return _cdiv(a, b) * b


# ---------------------------------------------------------------------------
# Bilinear (align_corners=True, i.e. nn.UpsamplingBilinear2d) operators (numpy)
# ---------------------------------------------------------------------------
def _bilinear_up_matrix(n_in, n_out):
    """U of shape (n_out, n_in) such that out = U @ in (align_corners=True)."""
    if n_out == 1 or n_in == 1:
        src = np.zeros((n_out,), np.float64)
    else:
        src = np.arange(n_out, dtype=np.float64) * (n_in - 1) / (n_out - 1)
    i0 = np.clip(np.floor(src).astype(np.int64), 0, n_in - 1)
    i1 = np.clip(i0 + 1, 0, n_in - 1)
    frac = (src - i0).astype(np.float32)
    U = np.zeros((n_out, n_in), np.float32)
    np.add.at(U, (np.arange(n_out), i0), 1.0 - frac)
    np.add.at(U, (np.arange(n_out), i1), frac)
    return U


def _kron_up(Uh, Uw):
    """M (h*w, H*W) with flat_out = flat_in @ M (row-major (h, w) flattening)."""
    Hh, h = Uh.shape
    Ww, w = Uw.shape
    M = np.einsum("Ii,Jj->ijIJ", Uh, Uw).reshape(h * w, Hh * Ww)
    # conv-before-upsample (bias folded through) is only valid if every output pixel's
    # interpolation weights sum to 1, i.e. every column of M sums to 1.
    assert np.allclose(M.sum(axis=0), 1.0, atol=1e-5)
    return M


# ---------------------------------------------------------------------------
# Forward builder: returns (prepare, apply).  prepare() is hoisted per-parameter-set
# weight prep; apply(kparams, e1, e2) runs the Pallas kernel.
# ---------------------------------------------------------------------------
def make_forward(output_shape=(16, 16, 1), e1_dim=8, e2_dim=8,
                 compute_dtype=jnp.bfloat16, btile_cap=128, out_dtype=jnp.float32):
    H, W, DEP = output_shape
    assert H % 8 == 0 and W % 8 == 0
    h8, w8 = H // 8, W // 8
    HW0, HW1, HW2, HW3 = h8 * w8, 4 * h8 * w8, 16 * h8 * w8, H * W
    F = 16 * H // 8 * W // 8        # same operator precedence as the PyTorch code
    E = e1_dim + e2_dim
    assert F == C0 * HW0

    # Static dense upsample operators (tiny at these shapes; see TODO for large H*W).
    M1n = _kron_up(_bilinear_up_matrix(h8, 2 * h8), _bilinear_up_matrix(w8, 2 * w8))
    M2n = _kron_up(_bilinear_up_matrix(2 * h8, 4 * h8), _bilinear_up_matrix(2 * w8, 4 * w8))
    M3n = _kron_up(_bilinear_up_matrix(4 * h8, H), _bilinear_up_matrix(4 * w8, W))

    cdt = jnp.dtype(compute_dtype)
    fast_sigmoid = cdt != jnp.dtype(jnp.float32)   # EUP approx-reciprocal on bf16 path

    # ------------------------------ kernel ---------------------------------
    def make_kernel(Bt):
        def sigmoid(t):
            if fast_sigmoid:
                return pl.reciprocal(1.0 + jnp.exp(-t), approx=True)
            return jax.nn.sigmoid(t)

        def conv1x1(slabs, wc_ref, bc_ref, c_out):
            # 1x1 conv over channels as an unrolled VPU scalar-FMA sum over channel
            # slabs (rows stay (channel, batch)-ordered); weights live in SMEM.
            outs = []
            for o in range(c_out):
                acc = slabs[0] * wc_ref[o, 0]
                for c in range(1, len(slabs)):
                    acc = acc + slabs[c] * wc_ref[o, c]
                outs.append(acc + bc_ref[0, o])
            return jnp.concatenate(outs, axis=0)            # (c_out*Bt, HW)

        def up_sigmoid(a, m_ref):
            # Bilinear upsample = one lane-major MXU matmul with f32 accumulation.
            t = jnp.dot(a.astype(cdt), m_ref[...], preferred_element_type=jnp.float32)
            return sigmoid(t)

        def kernel(x_ref, wfc_ref, beta_ref, m1_ref, m2_ref, m3_ref,
                   wc1_ref, bc1_ref, wc2_ref, bc2_ref, wc3_ref, bc3_ref, out_ref):
            # fc1 (+ folded BatchNorm1d eval stats + fc bias) + ReLU, all f32.
            h = jnp.dot(x_ref[...], wfc_ref[...], preferred_element_type=jnp.float32)
            h = jnp.maximum(h + beta_ref[...], 0.0)          # (Bt, F), cols = (c, hw)

            # Stage 1: channel slabs are sliced straight out of the fc output (this
            # fuses the (Bt, C0*HW0) -> (C0*Bt, HW0) regroup into the first conv).
            # Each stage runs the 1x1 conv BEFORE the upsample; valid because the
            # upsample columns sum to 1 (asserted at build time).
            slabs = [h[:, c * HW0:(c + 1) * HW0] for c in range(C0)]
            y = up_sigmoid(conv1x1(slabs, wc1_ref, bc1_ref, C1), m1_ref)   # (C1*Bt, HW1)

            slabs = [y[c * Bt:(c + 1) * Bt, :] for c in range(C1)]
            y = up_sigmoid(conv1x1(slabs, wc2_ref, bc2_ref, C2), m2_ref)   # (C2*Bt, HW2)

            slabs = [y[c * Bt:(c + 1) * Bt, :] for c in range(C2)]
            y = up_sigmoid(conv1x1(slabs, wc3_ref, bc3_ref, DEP), m3_ref)  # (DEP*Bt, HW3)
            y = y * 255.0

            # Store directly in (batch, depth, H*W) order (lane-dense output).
            for d in range(DEP):
                out_ref[:, d, :] = y[d * Bt:(d + 1) * Bt, :].astype(out_ref.dtype)

        return kernel

    # --------------------- parameter prep (hoisted, run once) ---------------
    def prepare(params):
        (Wfc, bfc, gamma, beta, rmean, rvar, Wc1, bc1, Wc2, bc2, Wc3, bc3) = params
        eps = 1e-5
        scale = gamma / jnp.sqrt(rvar + eps)                          # (F,)
        shift = beta - rmean * scale
        wfc_k = (Wfc * scale[None, :]).astype(jnp.float32)            # (E, F) keep f32
        beta_k = ((bfc * scale + shift)[None, :]).astype(jnp.float32)  # (1, F)
        m1 = jnp.asarray(M1n, cdt)
        m2 = jnp.asarray(M2n, cdt)
        m3 = jnp.asarray(M3n, cdt)

        def smem2d(a):
            a = jnp.asarray(a, jnp.float32)
            return a if a.ndim == 2 else a[None, :]

        return (wfc_k, beta_k, m1, m2, m3,
                smem2d(Wc1), smem2d(bc1), smem2d(Wc2), smem2d(bc2),
                smem2d(Wc3), smem2d(bc3))

    # --------------------------- pallas_call wrapper ------------------------
    def apply(kparams, e1, e2):
        (wfc_k, beta_k, m1, m2, m3, wc1, bc1, wc2, bc2, wc3, bc3) = kparams
        bs = e1.shape[0]

        # Batch tile: multiple of 8, <= btile_cap, and >= 2 grid steps once bs >= 16
        # so dimension_semantics=("parallel",) can use both v7x TensorCores.
        n_tiles = max(2 if bs >= 16 else 1, _cdiv(bs, btile_cap))
        Bt = _round_up(_cdiv(bs, n_tiles), 8)
        bs_p = Bt * n_tiles

        # TODO(synk): e1 dropout is eval-mode identity.
        x = jnp.concatenate([e1, e2], axis=1).astype(jnp.float32)     # (bs, E)
        if bs_p != bs:
            x = jnp.pad(x, ((0, bs_p - bs), (0, 0)))

        # VMEM budget from the actual live buffers (pipelined blocks double-buffered),
        # clamped to ~85% of the chip capacity (v7x: 64 MiB per TensorCore).
        csz = cdt.itemsize
        const_b = (E * F + F) * 4 + (HW0 * HW1 + HW1 * HW2 + HW2 * HW3) * csz
        io_b = Bt * E * 4 + Bt * DEP * HW3 * jnp.dtype(out_dtype).itemsize
        act_b = (4 * Bt * (F + C1 * HW0 + C1 * HW1 + C2 * HW1 + C2 * HW2
                           + DEP * HW2 + 2 * DEP * HW3)
                 + csz * Bt * (C1 * HW0 + C2 * HW1 + DEP * HW2))
        needed = 2 * (const_b + io_b) + act_b
        cap = 64 << 20
        try:
            cap = int(getattr(pltpu.get_tpu_info(), "vmem_capacity_bytes", cap))
        except Exception:
            pass
        vmem_limit = int(min(cap * 85 // 100, max(needed + (4 << 20), 8 << 20)))

        smem_spec = pl.BlockSpec(memory_space=pltpu.MemorySpace.SMEM)
        in_specs = [
            pl.BlockSpec((Bt, E), lambda g: (g, 0)),        # x batch tile
            pl.BlockSpec((E, F), lambda g: (0, 0)),         # folded fc weight (f32)
            pl.BlockSpec((1, F), lambda g: (0, 0)),         # folded fc/BN bias
            pl.BlockSpec((HW0, HW1), lambda g: (0, 0)),     # upsample 1
            pl.BlockSpec((HW1, HW2), lambda g: (0, 0)),     # upsample 2
            pl.BlockSpec((HW2, HW3), lambda g: (0, 0)),     # upsample 3
            smem_spec, smem_spec, smem_spec,                # conv1 W/b, conv2 W
            smem_spec, smem_spec, smem_spec,                # conv2 b, conv3 W/b
        ]

        out = pl.pallas_call(
            make_kernel(Bt),
            out_shape=jax.ShapeDtypeStruct((bs_p, DEP, HW3), out_dtype),
            grid=(bs_p // Bt,),
            in_specs=in_specs,
            out_specs=pl.BlockSpec((Bt, DEP, HW3), lambda g: (g, 0, 0)),
            compiler_params=pltpu.CompilerParams(
                dimension_semantics=("parallel",),
                vmem_limit_bytes=vmem_limit),
        )(x, wfc_k, beta_k, m1, m2, m3, wc1, bc1, wc2, bc2, wc3, bc3)

        # Output already in (b, d, hw) order: no transpose, just crop padding + reshape.
        return out[:bs].reshape(bs, DEP, H, W)

    return prepare, apply


# ---------------------------------------------------------------------------
# Parameters + pure-JAX reference (mirrors the PyTorch forward, eval mode)
# ---------------------------------------------------------------------------
def init_params(key, output_shape, e1_dim, e2_dim):
    H, W, DEP = output_shape
    F = 16 * H // 8 * W // 8
    E = e1_dim + e2_dim
    ks = jax.random.split(key, 12)
    f32 = jnp.float32
    Wfc = 0.1 * jax.random.normal(ks[0], (E, F), f32)
    bfc = 0.1 * jax.random.normal(ks[1], (F,), f32)
    gamma = 1.0 + 0.1 * jax.random.normal(ks[2], (F,), f32)
    beta = 0.1 * jax.random.normal(ks[3], (F,), f32)
    rmean = 0.1 * jax.random.normal(ks[4], (F,), f32)
    rvar = 0.5 + jnp.abs(jax.random.normal(ks[5], (F,), f32))
    Wc1 = 0.2 * jax.random.normal(ks[6], (C1, C0), f32)
    bc1 = 0.1 * jax.random.normal(ks[7], (C1,), f32)
    Wc2 = 0.2 * jax.random.normal(ks[8], (C2, C1), f32)
    bc2 = 0.1 * jax.random.normal(ks[9], (C2,), f32)
    Wc3 = 0.2 * jax.random.normal(ks[10], (DEP, C2), f32)
    bc3 = 0.1 * jax.random.normal(ks[11], (DEP,), f32)
    return (Wfc, bfc, gamma, beta, rmean, rvar, Wc1, bc1, Wc2, bc2, Wc3, bc3)


def reference(params, e1, e2, output_shape):
    (Wfc, bfc, gamma, beta, rmean, rvar, Wc1, bc1, Wc2, bc2, Wc3, bc3) = params
    H, W, DEP = output_shape
    h8, w8 = H // 8, W // 8
    bs = e1.shape[0]
    eps = 1e-5
    x = jnp.concatenate([e1, e2], axis=1)
    h = x @ Wfc + bfc
    h = gamma * (h - rmean) / jnp.sqrt(rvar + eps) + beta
    h = jnp.maximum(h, 0.0)
    t = h.reshape(bs, C0, h8, w8)

    def up(t, Uh, Uw):
        t = jnp.einsum("Hh,bchw->bcHw", jnp.asarray(Uh), t)
        return jnp.einsum("Ww,bchw->bchW", jnp.asarray(Uw), t)

    def conv(t, Wc, bc):
        return jnp.einsum("oc,bchw->bohw", Wc, t) + bc.reshape(1, -1, 1, 1)

    t = jax.nn.sigmoid(conv(up(t, _bilinear_up_matrix(h8, 2 * h8),
                               _bilinear_up_matrix(w8, 2 * w8)), Wc1, bc1))
    t = jax.nn.sigmoid(conv(up(t, _bilinear_up_matrix(2 * h8, 4 * h8),
                               _bilinear_up_matrix(2 * w8, 4 * w8)), Wc2, bc2))
    t = jax.nn.sigmoid(conv(up(t, _bilinear_up_matrix(4 * h8, H),
                               _bilinear_up_matrix(4 * w8, W)), Wc3, bc3))
    return t * 255.0


if __name__ == "__main__":
    output_shape = (16, 16, 1)        # (H, W, depth); H, W divisible by 8
    e1_dim = e2_dim = 8
    bs = 2

    key = jax.random.PRNGKey(0)
    kp, k1, k2 = jax.random.split(key, 3)
    params = init_params(kp, output_shape, e1_dim, e2_dim)
    e1 = jax.random.normal(k1, (bs, e1_dim), jnp.float32)
    e2 = jax.random.normal(k2, (bs, e2_dim), jnp.float32)
    ref = reference(params, e1, e2, output_shape)

    # f32 compute path: tight check against the pure-JAX reference.
    prep32, apply32 = make_forward(output_shape, e1_dim, e2_dim,
                                   compute_dtype=jnp.float32)
    kp32 = jax.block_until_ready(prep32(params))          # hoisted: once per param set
    out32 = jax.block_until_ready(jax.jit(apply32)(kp32, e1, e2))
    assert out32.shape == (bs, output_shape[2], output_shape[0], output_shape[1])
    err32 = float(jnp.max(jnp.abs(out32 - ref)))
    assert jnp.allclose(out32, ref, rtol=1e-3, atol=5e-2), err32

    # bf16 matmul operands (MXU-native on v6e/v7x) + EUP sigmoid: loose check.
    prep16, apply16 = make_forward(output_shape, e1_dim, e2_dim,
                                   compute_dtype=jnp.bfloat16)
    kp16 = jax.block_until_ready(prep16(params))
    apply16_j = jax.jit(apply16)
    out16 = jax.block_until_ready(apply16_j(kp16, e1, e2))
    err16 = float(jnp.max(jnp.abs(out16 - ref)))
    assert err16 < 4.0, err16

    # Larger batch: exercises the multi-tile (megacore-friendly) grid path.
    bsL = 32
    e1L = jax.random.normal(k1, (bsL, e1_dim), jnp.float32)
    e2L = jax.random.normal(k2, (bsL, e2_dim), jnp.float32)
    refL = reference(params, e1L, e2L, output_shape)
    outL = jax.block_until_ready(apply16_j(kp16, e1L, e2L))
    errL = float(jnp.max(jnp.abs(outL - refL)))
    assert errL < 4.0, errL

    print("KERNEL_OK")
</pallas_src>

<mosaic_0001>
module attributes {stable_mosaic.version = 11 : i64} {
  func.func @kernel(%arg0: i32, %arg1: memref<8x16xf32, #tpu.memory_space<vmem>>, %arg2: memref<16x64xf32, #tpu.memory_space<vmem>>, %arg3: memref<1x64xf32, #tpu.memory_space<vmem>>, %arg4: memref<4x16xf32, #tpu.memory_space<vmem>>, %arg5: memref<16x64xf32, #tpu.memory_space<vmem>>, %arg6: memref<64x256xf32, #tpu.memory_space<vmem>>, %arg7: memref<6x16xf32, #tpu.memory_space<smem>>, %arg8: memref<1x6xf32, #tpu.memory_space<smem>>, %arg9: memref<6x6xf32, #tpu.memory_space<smem>>, %arg10: memref<1x6xf32, #tpu.memory_space<smem>>, %arg11: memref<1x6xf32, #tpu.memory_space<smem>>, %arg12: memref<1x1xf32, #tpu.memory_space<smem>>, %arg13: memref<8x1x256xf32, #tpu.memory_space<vmem>>) attributes {dimension_semantics = [#tpu.dimension_semantics<parallel>], iteration_bounds = array<i64: 1>, scalar_prefetch = 0 : i64, scratch_operands = 0 : i64, tpu.core_type = #tpu.core_type<tc>, window_params = [{transform_indices = @transform_0, window_bounds = array<i64: 8, 16>}, {pipeline_mode = #tpu.pipeline_mode<synchronous>, transform_indices = @transform_1, window_bounds = array<i64: 16, 64>}, {pipeline_mode = #tpu.pipeline_mode<synchronous>, transform_indices = @transform_2, window_bounds = array<i64: 1, 64>}, {pipeline_mode = #tpu.pipeline_mode<synchronous>, transform_indices = @transform_3, window_bounds = array<i64: 4, 16>}, {pipeline_mode = #tpu.pipeline_mode<synchronous>, transform_indices = @transform_4, window_bounds = array<i64: 16, 64>}, {pipeline_mode = #tpu.pipeline_mode<synchronous>, transform_indices = @transform_5, window_bounds = array<i64: 64, 256>}, {transform_indices = @transform_6, window_bounds = array<i64: 6, 16>}, {transform_indices = @transform_7, window_bounds = array<i64: 1, 6>}, {transform_indices = @transform_8, window_bounds = array<i64: 6, 6>}, {transform_indices = @transform_9, window_bounds = array<i64: 1, 6>}, {transform_indices = @transform_10, window_bounds = array<i64: 1, 6>}, {transform_indices = @transform_11, window_bounds = array<i64: 1, 1>}, {transform_indices = @transform_12, window_bounds = array<i64: 8, 1, 256>}]} {
    %c0 = arith.constant 0 : index
    %c0_0 = arith.constant 0 : index
    %0 = vector.load %arg1[%c0, %c0_0] : memref<8x16xf32, #tpu.memory_space<vmem>>, vector<8x16xf32>
    %c0_1 = arith.constant 0 : index
    %c0_2 = arith.constant 0 : index
    %1 = vector.load %arg2[%c0_1, %c0_2] : memref<16x64xf32, #tpu.memory_space<vmem>>, vector<16x64xf32>
    %cst = arith.constant dense<0.000000e+00> : vector<8x64xf32>
    %2 = tpu.matmul %0, %1, %cst {dimension_numbers = #tpu.dot_dimension_numbers<[1], [0], [0], [1], [0, 0, 1, 1], [], []>} : vector<8x16xf32>, vector<16x64xf32>, vector<8x64xf32> -> vector<8x64xf32>
    %c0_3 = arith.constant 0 : index
    %c0_4 = arith.constant 0 : index
    %3 = vector.load %arg3[%c0_3, %c0_4] : memref<1x64xf32, #tpu.memory_space<vmem>>, vector<1x64xf32>
    %4 = vector.broadcast %3 : vector<1x64xf32> to vector<8x64xf32>
    %5 = arith.addf %2, %4 : vector<8x64xf32>
    %cst_5 = arith.constant 0.000000e+00 : f32
    %6 = vector.broadcast %cst_5 : f32 to vector<8x64xf32>
    %7 = arith.maximumf %5, %6 : vector<8x64xf32>
    %8 = vector.extract_strided_slice %7 {offsets = [0, 0], sizes = [8, 4], strides = [1, 1]} : vector<8x64xf32> to vector<8x4xf32>
    %9 = vector.extract_strided_slice %7 {offsets = [0, 4], sizes = [8, 4], strides = [1, 1]} : vector<8x64xf32> to vector<8x4xf32>
    %10 = vector.extract_strided_slice %7 {offsets = [0, 8], sizes = [8, 4], strides = [1, 1]} : vector<8x64xf32> to vector<8x4xf32>
    %11 = vector.extract_strided_slice %7 {offsets = [0, 12], sizes = [8, 4], strides = [1, 1]} : vector<8x64xf32> to vector<8x4xf32>
    %12 = vector.extract_strided_slice %7 {offsets = [0, 16], sizes = [8, 4], strides = [1, 1]} : vector<8x64xf32> to vector<8x4xf32>
    %13 = vector.extract_strided_slice %7 {offsets = [0, 20], sizes = [8, 4], strides = [1, 1]} : vector<8x64xf32> to vector<8x4xf32>
    %14 = vector.extract_strided_slice %7 {offsets = [0, 24], sizes = [8, 4], strides = [1, 1]} : vector<8x64xf32> to vector<8x4xf32>
    %15 = vector.extract_strided_slice %7 {offsets = [0, 28], sizes = [8, 4], strides = [1, 1]} : vector<8x64xf32> to vector<8x4xf32>
    %16 = vector.extract_strided_slice %7 {offsets = [0, 32], sizes = [8, 4], strides = [1, 1]} : vector<8x64xf32> to vector<8x4xf32>
    %17 = vector.extract_strided_slice %7 {offsets = [0, 36], sizes = [8, 4], strides = [1, 1]} : vector<8x64xf32> to vector<8x4xf32>
    %18 = vector.extract_strided_slice %7 {offsets = [0, 40], sizes = [8, 4], strides = [1, 1]} : vector<8x64xf32> to vector<8x4xf32>
    %19 = vector.extract_strided_slice %7 {offsets = [0, 44], sizes = [8, 4], strides = [1, 1]} : vector<8x64xf32> to vector<8x4xf32>
    %20 = vector.extract_strided_slice %7 {offsets = [0, 48], sizes = [8, 4], strides = [1, 1]} : vector<8x64xf32> to vector<8x4xf32>
    %21 = vector.extract_strided_slice %7 {offsets = [0, 52], sizes = [8, 4], strides = [1, 1]} : vector<8x64xf32> to vector<8x4xf32>
    %22 = vector.extract_strided_slice %7 {offsets = [0, 56], sizes = [8, 4], strides = [1, 1]} : vector<8x64xf32> to vector<8x4xf32>
    %23 = vector.extract_strided_slice %7 {offsets = [0, 60], sizes = [8, 4], strides = [1, 1]} : vector<8x64xf32> to vector<8x4xf32>
    %c0_6 = arith.constant 0 : index
    %c0_7 = arith.constant 0 : index
    %24 = memref.load %arg7[%c0_6, %c0_7] : memref<6x16xf32, #tpu.memory_space<smem>>
    %25 = vector.broadcast %24 : f32 to vector<8x4xf32>
    %26 = arith.mulf %8, %25 : vector<8x4xf32>
    %c0_8 = arith.constant 0 : index
    %c1 = arith.constant 1 : index
    %27 = memref.load %arg7[%c0_8, %c1] : memref<6x16xf32, #tpu.memory_space<smem>>
    %28 = vector.broadcast %27 : f32 to vector<8x4xf32>
    %29 = arith.mulf %9, %28 : vector<8x4xf32>
    %30 = arith.addf %26, %29 : vector<8x4xf32>
    %c0_9 = arith.constant 0 : index
    %c2 = arith.constant 2 : index
    %31 = memref.load %arg7[%c0_9, %c2] : memref<6x16xf32, #tpu.memory_space<smem>>
    %32 = vector.broadcast %31 : f32 to vector<8x4xf32>
    %33 = arith.mulf %10, %32 : vector<8x4xf32>
    %34 = arith.addf %30, %33 : vector<8x4xf32>
    %c0_10 = arith.constant 0 : index
    %c3 = arith.constant 3 : index
    %35 = memref.load %arg7[%c0_10, %c3] : memref<6x16xf32, #tpu.memory_space<smem>>
    %36 = vector.broadcast %35 : f32 to vector<8x4xf32>
    %37 = arith.mulf %11, %36 : vector<8x4xf32>
    %38 = arith.addf %34, %37 : vector<8x4xf32>
    %c0_11 = arith.constant 0 : index
    %c4 = arith.constant 4 : index
    %39 = memref.load %arg7[%c0_11, %c4] : memref<6x16xf32, #tpu.memory_space<smem>>
    %40 = vector.broadcast %39 : f32 to vector<8x4xf32>
    %41 = arith.mulf %12, %40 : vector<8x4xf32>
    %42 = arith.addf %38, %41 : vector<8x4xf32>
    %c0_12 = arith.constant 0 : index
    %c5 = arith.constant 5 : index
    %43 = memref.load %arg7[%c0_12, %c5] : memref<6x16xf32, #tpu.memory_space<smem>>
    %44 = vector.broadcast %43 : f32 to vector<8x4xf32>
    %45 = arith.mulf %13, %44 : vector<8x4xf32>
    %46 = arith.addf %42, %45 : vector<8x4xf32>
    %c0_13 = arith.constant 0 : index
    %c6 = arith.constant 6 : index
    %47 = memref.load %arg7[%c0_13, %c6] : memref<6x16xf32, #tpu.memory_space<smem>>
    %48 = vector.broadcast %47 : f32 to vector<8x4xf32>
    %49 = arith.mulf %14, %48 : vector<8x4xf32>
    %50 = arith.addf %46, %49 : vector<8x4xf32>
    %c0_14 = arith.constant 0 : index
    %c7 = arith.constant 7 : index
    %51 = memref.load %arg7[%c0_14, %c7] : memref<6x16xf32, #tpu.memory_space<smem>>
    %52 = vector.broadcast %51 : f32 to vector<8x4xf32>
    %53 = arith.mulf %15, %52 : vector<8x4xf32>
    %54 = arith.addf %50, %53 : vector<8x4xf32>
    %c0_15 = arith.constant 0 : index
    %c8 = arith.constant 8 : index
    %55 = memref.load %arg7[%c0_15, %c8] : memref<6x16xf32, #tpu.memory_space<smem>>
    %56 = vector.broadcast %55 : f32 to vector<8x4xf32>
    %57 = arith.mulf %16, %56 : vector<8x4xf32>
    %58 = arith.addf %54, %57 : vector<8x4xf32>
    %c0_16 = arith.constant 0 : index
    %c9 = arith.constant 9 : index
    %59 = memref.load %arg7[%c0_16, %c9] : memref<6x16xf32, #tpu.memory_space<smem>>
    %60 = vector.broadcast %59 : f32 to vector<8x4xf32>
    %61 = arith.mulf %17, %60 : vector<8x4xf32>
    %62 = arith.addf %58, %61 : vector<8x4xf32>
    %c0_17 = arith.constant 0 : index
    %c10 = arith.constant 10 : index
    %63 = memref.load %arg7[%c0_17, %c10] : memref<6x16xf32, #tpu.memory_space<smem>>
    %64 = vector.broadcast %63 : f32 to vector<8x4xf32>
    %65 = arith.mulf %18, %64 : vector<8x4xf32>
    %66 = arith.addf %62, %65 : vector<8x4xf32>
    %c0_18 = arith.constant 0 : index
    %c11 = arith.constant 11 : index
    %67 = memref.load %arg7[%c0_18, %c11] : memref<6x16xf32, #tpu.memory_space<smem>>
    %68 = vector.broadcast %67 : f32 to vector<8x4xf32>
    %69 = arith.mulf %19, %68 : vector<8x4xf32>
    %70 = arith.addf %66, %69 : vector<8x4xf32>
    %c0_19 = arith.constant 0 : index
    %c12 = arith.constant 12 : index
    %71 = memref.load %arg7[%c0_19, %c12] : memref<6x16xf32, #tpu.memory_space<smem>>
    %72 = vector.broadcast %71 : f32 to vector<8x4xf32>
    %73 = arith.mulf %20, %72 : vector<8x4xf32>
    %74 = arith.addf %70, %73 : vector<8x4xf32>
    %c0_20 = arith.constant 0 : index
    %c13 = arith.constant 13 : index
    %75 = memref.load %arg7[%c0_20, %c13] : memref<6x16xf32, #tpu.memory_space<smem>>
    %76 = vector.broadcast %75 : f32 to vector<8x4xf32>
    %77 = arith.mulf %21, %76 : vector<8x4xf32>
    %78 = arith.addf %74, %77 : vector<8x4xf32>
    %c0_21 = arith.constant 0 : index
    %c14 = arith.constant 14 : index
    %79 = memref.load %arg7[%c0_21, %c14] : memref<6x16xf32, #tpu.memory_space<smem>>
    %80 = vector.broadcast %79 : f32 to vector<8x4xf32>
    %81 = arith.mulf %22, %80 : vector<8x4xf32>
    %82 = arith.addf %78, %81 : vector<8x4xf32>
    %c0_22 = arith.constant 0 : index
    %c15 = arith.constant 15 : index
    %83 = memref.load %arg7[%c0_22, %c15] : memref<6x16xf32, #tpu.memory_space<smem>>
    %84 = vector.broadcast %83 : f32 to vector<8x4xf32>
    %85 = arith.mulf %23, %84 : vector<8x4xf32>
    %86 = arith.addf %82, %85 : vector<8x4xf32>
    %c0_23 = arith.constant 0 : index
    %c0_24 = arith.constant 0 : index
    %87 = memref.load %arg8[%c0_23, %c0_24] : memref<1x6xf32, #tpu.memory_space<smem>>
    %88 = vector.broadcast %87 : f32 to vector<8x4xf32>
    %89 = arith.addf %86, %88 : vector<8x4xf32>
    %c1_25 = arith.constant 1 : index
    %c0_26 = arith.constant 0 : index
    %90 = memref.load %arg7[%c1_25, %c0_26] : memref<6x16xf32, #tpu.memory_space<smem>>
    %91 = vector.broadcast %90 : f32 to vector<8x4xf32>
    %92 = arith.mulf %8, %91 : vector<8x4xf32>
    %c1_27 = arith.constant 1 : index
    %c1_28 = arith.constant 1 : index
    %93 = memref.load %arg7[%c1_27, %c1_28] : memref<6x16xf32, #tpu.memory_space<smem>>
    %94 = vector.broadcast %93 : f32 to vector<8x4xf32>
    %95 = arith.mulf %9, %94 : vector<8x4xf32>
    %96 = arith.addf %92, %95 : vector<8x4xf32>
    %c1_29 = arith.constant 1 : index
    %c2_30 = arith.constant 2 : index
    %97 = memref.load %arg7[%c1_29, %c2_30] : memref<6x16xf32, #tpu.memory_space<smem>>
    %98 = vector.broadcast %97 : f32 to vector<8x4xf32>
    %99 = arith.mulf %10, %98 : vector<8x4xf32>
    %100 = arith.addf %96, %99 : vector<8x4xf32>
    %c1_31 = arith.constant 1 : index
    %c3_32 = arith.constant 3 : index
    %101 = memref.load %arg7[%c1_31, %c3_32] : memref<6x16xf32, #tpu.memory_space<smem>>
    %102 = vector.broadcast %101 : f32 to vector<8x4xf32>
    %103 = arith.mulf %11, %102 : vector<8x4xf32>
    %104 = arith.addf %100, %103 : vector<8x4xf32>
    %c1_33 = arith.constant 1 : index
    %c4_34 = arith.constant 4 : index
    %105 = memref.load %arg7[%c1_33, %c4_34] : memref<6x16xf32, #tpu.memory_space<smem>>
    %106 = vector.broadcast %105 : f32 to vector<8x4xf32>
    %107 = arith.mulf %12, %106 : vector<8x4xf32>
    %108 = arith.addf %104, %107 : vector<8x4xf32>
    %c1_35 = arith.constant 1 : index
    %c5_36 = arith.constant 5 : index
    %109 = memref.load %arg7[%c1_35, %c5_36] : memref<6x16xf32, #tpu.memory_space<smem>>
    %110 = vector.broadcast %109 : f32 to vector<8x4xf32>
    %111 = arith.mulf %13, %110 : vector<8x4xf32>
    %112 = arith.addf %108, %111 : vector<8x4xf32>
    %c1_37 = arith.constant 1 : index
    %c6_38 = arith.constant 6 : index
    %113 = memref.load %arg7[%c1_37, %c6_38] : memref<6x16xf32, #tpu.memory_space<smem>>
    %114 = vector.broadcast %113 : f32 to vector<8x4xf32>
    %115 = arith.mulf %14, %114 : vector<8x4xf32>
    %116 = arith.addf %112, %115 : vector<8x4xf32>
    %c1_39 = arith.constant 1 : index
    %c7_40 = arith.constant 7 : index
    %117 = memref.load %arg7[%c1_39, %c7_40] : memref<6x16xf32, #tpu.memory_space<smem>>
    %118 = vector.broadcast %117 : f32 to vector<8x4xf32>
    %119 = arith.mulf %15, %118 : vector<8x4xf32>
    %120 = arith.addf %116, %119 : vector<8x4xf32>
    %c1_41 = arith.constant 1 : index
    %c8_42 = arith.constant 8 : index
    %121 = memref.load %arg7[%c1_41, %c8_42] : memref<6x16xf32, #tpu.memory_space<smem>>
    %122 = vector.broadcast %121 : f32 to vector<8x4xf32>
    %123 = arith.mulf %16, %122 : vector<8x4xf32>
    %124 = arith.addf %120, %123 : vector<8x4xf32>
    %c1_43 = arith.constant 1 : index
    %c9_44 = arith.constant 9 : index
    %125 = memref.load %arg7[%c1_43, %c9_44] : memref<6x16xf32, #tpu.memory_space<smem>>
    %126 = vector.broadcast %125 : f32 to vector<8x4xf32>
    %127 = arith.mulf %17, %126 : vector<8x4xf32>
    %128 = arith.addf %124, %127 : vector<8x4xf32>
    %c1_45 = arith.constant 1 : index
    %c10_46 = arith.constant 10 : index
    %129 = memref.load %arg7[%c1_45, %c10_46] : memref<6x16xf32, #tpu.memory_space<smem>>
    %130 = vector.broadcast %129 : f32 to vector<8x4xf32>
    %131 = arith.mulf %18, %130 : vector<8x4xf32>
    %132 = arith.addf %128, %131 : vector<8x4xf32>
    %c1_47 = arith.constant 1 : index
    %c11_48 = arith.constant 11 : index
    %133 = memref.load %arg7[%c1_47, %c11_48] : memref<6x16xf32, #tpu.memory_space<smem>>
    %134 = vector.broadcast %133 : f32 to vector<8x4xf32>
    %135 = arith.mulf %19, %134 : vector<8x4xf32>
    %136 = arith.addf %132, %135 : vector<8x4xf32>
    %c1_49 = arith.constant 1 : index
    %c12_50 = arith.constant 12 : index
    %137 = memref.load %arg7[%c1_49, %c12_50] : memref<6x16xf32, #tpu.memory_space<smem>>
    %138 = vector.broadcast %137 : f32 to vector<8x4xf32>
    %139 = arith.mulf %20, %138 : vector<8x4xf32>
    %140 = arith.addf %136, %139 : vector<8x4xf32>
    %c1_51 = arith.constant 1 : index
    %c13_52 = arith.constant 13 : index
    %141 = memref.load %arg7[%c1_51, %c13_52] : memref<6x16xf32, #tpu.memory_space<smem>>
    %142 = vector.broadcast %141 : f32 to vector<8x4xf32>
    %143 = arith.mulf %21, %142 : vector<8x4xf32>
    %144 = arith.addf %140, %143 : vector<8x4xf32>
    %c1_53 = arith.constant 1 : index
    %c14_54 = arith.constant 14 : index
    %145 = memref.load %arg7[%c1_53, %c14_54] : memref<6x16xf32, #tpu.memory_space<smem>>
    %146 = vector.broadcast %145 : f32 to vector<8x4xf32>
    %147 = arith.mulf %22, %146 : vector<8x4xf32>
    %148 = arith.addf %144, %147 : vector<8x4xf32>
    %c1_55 = arith.constant 1 : index
    %c15_56 = arith.constant 15 : index
    %149 = memref.load %arg7[%c1_55, %c15_56] : memref<6x16xf32, #tpu.memory_space<smem>>
    %150 = vector.broadcast %149 : f32 to vector<8x4xf32>
    %151 = arith.mulf %23, %150 : vector<8x4xf32>
    %152 = arith.addf %148, %151 : vector<8x4xf32>
    %c0_57 = arith.constant 0 : index
    %c1_58 = arith.constant 1 : index
    %153 = memref.load %arg8[%c0_57, %c1_58] : memref<1x6xf32, #tpu.memory_space<smem>>
    %154 = vector.broadcast %153 : f32 to vector<8x4xf32>
    %155 = arith.addf %152, %154 : vector<8x4xf32>
    %c2_59 = arith.constant 2 : index
    %c0_60 = arith.constant 0 : index
    %156 = memref.load %arg7[%c2_59, %c0_60] : memref<6x16xf32, #tpu.memory_space<smem>>
    %157 = vector.broadcast %156 : f32 to vector<8x4xf32>
    %158 = arith.mulf %8, %157 : vector<8x4xf32>
    %c2_61 = arith.constant 2 : index
    %c1_62 = arith.constant 1 : index
    %159 = memref.load %arg7[%c2_61, %c1_62] : memref<6x16xf32, #tpu.memory_space<smem>>
    %160 = vector.broadcast %159 : f32 to vector<8x4xf32>
    %161 = arith.mulf %9, %160 : vector<8x4xf32>
    %162 = arith.addf %158, %161 : vector<8x4xf32>
    %c2_63 = arith.constant 2 : index
    %c2_64 = arith.constant 2 : index
    %163 = memref.load %arg7[%c2_63, %c2_64] : memref<6x16xf32, #tpu.memory_space<smem>>
    %164 = vector.broadcast %163 : f32 to vector<8x4xf32>
    %165 = arith.mulf %10, %164 : vector<8x4xf32>
    %166 = arith.addf %162, %165 : vector<8x4xf32>
    %c2_65 = arith.constant 2 : index
    %c3_66 = arith.constant 3 : index
    %167 = memref.load %arg7[%c2_65, %c3_66] : memref<6x16xf32, #tpu.memory_space<smem>>
    %168 = vector.broadcast %167 : f32 to vector<8x4xf32>
    %169 = arith.mulf %11, %168 : vector<8x4xf32>
    %170 = arith.addf %166, %169 : vector<8x4xf32>
    %c2_67 = arith.constant 2 : index
    %c4_68 = arith.constant 4 : index
    %171 = memref.load %arg7[%c2_67, %c4_68] : memref<6x16xf32, #tpu.memory_space<smem>>
    %172 = vector.broadcast %171 : f32 to vector<8x4xf32>
    %173 = arith.mulf %12, %172 : vector<8x4xf32>
    %174 = arith.addf %170, %173 : vector<8x4xf32>
    %c2_69 = arith.constant 2 : index
    %c5_70 = arith.constant 5 : index
    %175 = memref.load %arg7[%c2_69, %c5_70] : memref<6x16xf32, #tpu.memory_space<smem>>
    %176 = vector.broadcast %175 : f32 to vector<8x4xf32>
    %177 = arith.mulf %13, %176 : vector<8x4xf32>
    %178 = arith.addf %174, %177 : vector<8x4xf32>
    %c2_71 = arith.constant 2 : index
    %c6_72 = arith.constant 6 : index
    %179 = memref.load %arg7[%c2_71, %c6_72] : memref<6x16xf32, #tpu.memory_space<smem>>
    %180 = vector.broadcast %179 : f32 to vector<8x4xf32>
    %181 = arith.mulf %14, %180 : vector<8x4xf32>
    %182 = arith.addf %178, %181 : vector<8x4xf32>
    %c2_73 = arith.constant 2 : index
    %c7_74 = arith.constant 7 : index
    %183 = memref.load %arg7[%c2_73, %c7_74] : memref<6x16xf32, #tpu.memory_space<smem>>
    %184 = vector.broadcast %183 : f32 to vector<8x4xf32>
    %185 = arith.mulf %15, %184 : vector<8x4xf32>
    %186 = arith.addf %182, %185 : vector<8x4xf32>
    %c2_75 = arith.constant 2 : index
    %c8_76 = arith.constant 8 : index
    %187 = memref.load %arg7[%c2_75, %c8_76] : memref<6x16xf32, #tpu.memory_space<smem>>
    %188 = vector.broadcast %187 : f32 to vector<8x4xf32>
    %189 = arith.mulf %16, %188 : vector<8x4xf32>
    %190 = arith.addf %186, %189 : vector<8x4xf32>
    %c2_77 = arith.constant 2 : index
    %c9_78 = arith.constant 9 : index
    %191 = memref.load %arg7[%c2_77, %c9_78] : memref<6x16xf32, #tpu.memory_space<smem>>
    %192 = vector.broadcast %191 : f32 to vector<8x4xf32>
    %193 = arith.mulf %17, %192 : vector<8x4xf32>
    %194 = arith.addf %190, %193 : vector<8x4xf32>
    %c2_79 = arith.constant 2 : index
    %c10_80 = arith.constant 10 : index
    %195 = memref.load %arg7[%c2_79, %c10_80] : memref<6x16xf32, #tpu.memory_space<smem>>
    %196 = vector.broadcast %195 : f32 to vector<8x4xf32>
    %197 = arith.mulf %18, %196 : vector<8x4xf32>
    %198 = arith.addf %194, %197 : vector<8x4xf32>
    %c2_81 = arith.constant 2 : index
    %c11_82 = arith.constant 11 : index
    %199 = memref.load %arg7[%c2_81, %c11_82] : memref<6x16xf32, #tpu.memory_space<smem>>
    %200 = vector.broadcast %199 : f32 to vector<8x4xf32>
    %201 = arith.mulf %19, %200 : vector<8x4xf32>
    %202 = arith.addf %198, %201 : vector<8x4xf32>
    %c2_83 = arith.constant 2 : index
    %c12_84 = arith.constant 12 : index
    %203 = memref.load %arg7[%c2_83, %c12_84] : memref<6x16xf32, #tpu.memory_space<smem>>
    %204 = vector.broadcast %203 : f32 to vector<8x4xf32>
    %205 = arith.mulf %20, %204 : vector<8x4xf32>
    %206 = arith.addf %202, %205 : vector<8x4xf32>
    %c2_85 = arith.constant 2 : index
    %c13_86 = arith.constant 13 : index
    %207 = memref.load %arg7[%c2_85, %c13_86] : memref<6x16xf32, #tpu.memory_space<smem>>
    %208 = vector.broadcast %207 : f32 to vector<8x4xf32>
    %209 = arith.mulf %21, %208 : vector<8x4xf32>
    %210 = arith.addf %206, %209 : vector<8x4xf32>
    %c2_87 = arith.constant 2 : index
    %c14_88 = arith.constant 14 : index
    %211 = memref.load %arg7[%c2_87, %c14_88] : memref<6x16xf32, #tpu.memory_space<smem>>
    %212 = vector.broadcast %211 : f32 to vector<8x4xf32>
    %213 = arith.mulf %22, %212 : vector<8x4xf32>
    %214 = arith.addf %210, %213 : vector<8x4xf32>
    %c2_89 = arith.constant 2 : index
    %c15_90 = arith.constant 15 : index
    %215 = memref.load %arg7[%c2_89, %c15_90] : memref<6x16xf32, #tpu.memory_space<smem>>
    %216 = vector.broadcast %215 : f32 to vector<8x4xf32>
    %217 = arith.mulf %23, %216 : vector<8x4xf32>
    %218 = arith.addf %214, %217 : vector<8x4xf32>
    %c0_91 = arith.constant 0 : index
    %c2_92 = arith.constant 2 : index
    %219 = memref.load %arg8[%c0_91, %c2_92] : memref<1x6xf32, #tpu.memory_space<smem>>
    %220 = vector.broadcast %219 : f32 to vector<8x4xf32>
    %221 = arith.addf %218, %220 : vector<8x4xf32>
    %c3_93 = arith.constant 3 : index
    %c0_94 = arith.constant 0 : index
    %222 = memref.load %arg7[%c3_93, %c0_94] : memref<6x16xf32, #tpu.memory_space<smem>>
    %223 = vector.broadcast %222 : f32 to vector<8x4xf32>
    %224 = arith.mulf %8, %223 : vector<8x4xf32>
    %c3_95 = arith.constant 3 : index
    %c1_96 = arith.constant 1 : index
    %225 = memref.load %arg7[%c3_95, %c1_96] : memref<6x16xf32, #tpu.memory_space<smem>>
    %226 = vector.broadcast %225 : f32 to vector<8x4xf32>
    %227 = arith.mulf %9, %226 : vector<8x4xf32>
    %228 = arith.addf %224, %227 : vector<8x4xf32>
    %c3_97 = arith.constant 3 : index
    %c2_98 = arith.constant 2 : index
    %229 = memref.load %arg7[%c3_97, %c2_98] : memref<6x16xf32, #tpu.memory_space<smem>>
    %230 = vector.broadcast %229 : f32 to vector<8x4xf32>
    %231 = arith.mulf %10, %230 : vector<8x4xf32>
    %232 = arith.addf %228, %231 : vector<8x4xf32>
    %c3_99 = arith.constant 3 : index
    %c3_100 = arith.constant 3 : index
    %233 = memref.load %arg7[%c3_99, %c3_100] : memref<6x16xf32, #tpu.memory_space<smem>>
    %234 = vector.broadcast %233 : f32 to vector<8x4xf32>
    %235 = arith.mulf %11, %234 : vector<8x4xf32>
    %236 = arith.addf %232, %235 : vector<8x4xf32>
    %c3_101 = arith.constant 3 : index
    %c4_102 = arith.constant 4 : index
    %237 = memref.load %arg7[%c3_101, %c4_102] : memref<6x16xf32, #tpu.memory_space<smem>>
    %238 = vector.broadcast %237 : f32 to vector<8x4xf32>
    %239 = arith.mulf %12, %238 : vector<8x4xf32>
    %240 = arith.addf %236, %239 : vector<8x4xf32>
    %c3_103 = arith.constant 3 : index
    %c5_104 = arith.constant 5 : index
    %241 = memref.load %arg7[%c3_103, %c5_104] : memref<6x16xf32, #tpu.memory_space<smem>>
    %242 = vector.broadcast %241 : f32 to vector<8x4xf32>
    %243 = arith.mulf %13, %242 : vector<8x4xf32>
    %244 = arith.addf %240, %243 : vector<8x4xf32>
    %c3_105 = arith.constant 3 : index
    %c6_106 = arith.constant 6 : index
    %245 = memref.load %arg7[%c3_105, %c6_106] : memref<6x16xf32, #tpu.memory_space<smem>>
    %246 = vector.broadcast %245 : f32 to vector<8x4xf32>
    %247 = arith.mulf %14, %246 : vector<8x4xf32>
    %248 = arith.addf %244, %247 : vector<8x4xf32>
    %c3_107 = arith.constant 3 : index
    %c7_108 = arith.constant 7 : index
    %249 = memref.load %arg7[%c3_107, %c7_108] : memref<6x16xf32, #tpu.memory_space<smem>>
    %250 = vector.broadcast %249 : f32 to vector<8x4xf32>
    %251 = arith.mulf %15, %250 : vector<8x4xf32>
    %252 = arith.addf %248, %251 : vector<8x4xf32>
    %c3_109 = arith.constant 3 : index
    %c8_110 = arith.constant 8 : index
    %253 = memref.load %arg7[%c3_109, %c8_110] : memref<6x16xf32, #tpu.memory_space<smem>>
    %254 = vector.broadcast %253 : f32 to vector<8x4xf32>
    %255 = arith.mulf %16, %254 : vector<8x4xf32>
    %256 = arith.addf %252, %255 : vector<8x4xf32>
    %c3_111 = arith.constant 3 : index
    %c9_112 = arith.constant 9 : index
    %257 = memref.load %arg7[%c3_111, %c9_112] : memref<6x16xf32, #tpu.memory_space<smem>>
    %258 = vector.broadcast %257 : f32 to vector<8x4xf32>
    %259 = arith.mulf %17, %258 : vector<8x4xf32>
    %260 = arith.addf %256, %259 : vector<8x4xf32>
    %c3_113 = arith.constant 3 : index
    %c10_114 = arith.constant 10 : index
    %261 = memref.load %arg7[%c3_113, %c10_114] : memref<6x16xf32, #tpu.memory_space<smem>>
    %262 = vector.broadcast %261 : f32 to vector<8x4xf32>
    %263 = arith.mulf %18, %262 : vector<8x4xf32>
    %264 = arith.addf %260, %263 : vector<8x4xf32>
    %c3_115 = arith.constant 3 : index
    %c11_116 = arith.constant 11 : index
    %265 = memref.load %arg7[%c3_115, %c11_116] : memref<6x16xf32, #tpu.memory_space<smem>>
    %266 = vector.broadcast %265 : f32 to vector<8x4xf32>
    %267 = arith.mulf %19, %266 : vector<8x4xf32>
    %268 = arith.addf %264, %267 : vector<8x4xf32>
    %c3_117 = arith.constant 3 : index
    %c12_118 = arith.constant 12 : index
    %269 = memref.load %arg7[%c3_117, %c12_118] : memref<6x16xf32, #tpu.memory_space<smem>>
    %270 = vector.broadcast %269 : f32 to vector<8x4xf32>
    %271 = arith.mulf %20, %270 : vector<8x4xf32>
    %272 = arith.addf %268, %271 : vector<8x4xf32>
    %c3_119 = arith.constant 3 : index
    %c13_120 = arith.constant 13 : index
    %273 = memref.load %arg7[%c3_119, %c13_120] : memref<6x16xf32, #tpu.memory_space<smem>>
    %274 = vector.broadcast %273 : f32 to vector<8x4xf32>
    %275 = arith.mulf %21, %274 : vector<8x4xf32>
    %276 = arith.addf %272, %275 : vector<8x4xf32>
    %c3_121 = arith.constant 3 : index
    %c14_122 = arith.constant 14 : index
    %277 = memref.load %arg7[%c3_121, %c14_122] : memref<6x16xf32, #tpu.memory_space<smem>>
    %278 = vector.broadcast %277 : f32 to vector<8x4xf32>
    %279 = arith.mulf %22, %278 : vector<8x4xf32>
    %280 = arith.addf %276, %279 : vector<8x4xf32>
    %c3_123 = arith.constant 3 : index
    %c15_124 = arith.constant 15 : index
    %281 = memref.load %arg7[%c3_123, %c15_124] : memref<6x16xf32, #tpu.memory_space<smem>>
    %282 = vector.broadcast %281 : f32 to vector<8x4xf32>
    %283 = arith.mulf %23, %282 : vector<8x4xf32>
    %284 = arith.addf %280, %283 : vector<8x4xf32>
    %c0_125 = arith.constant 0 : index
    %c3_126 = arith.constant 3 : index
    %285 = memref.load %arg8[%c0_125, %c3_126] : memref<1x6xf32, #tpu.memory_space<smem>>
    %286 = vector.broadcast %285 : f32 to vector<8x4xf32>
    %287 = arith.addf %284, %286 : vector<8x4xf32>
    %c4_127 = arith.constant 4 : index
    %c0_128 = arith.constant 0 : index
    %288 = memref.load %arg7[%c4_127, %c0_128] : memref<6x16xf32, #tpu.memory_space<smem>>
    %289 = vector.broadcast %288 : f32 to vector<8x4xf32>
    %290 = arith.mulf %8, %289 : vector<8x4xf32>
    %c4_129 = arith.constant 4 : index
    %c1_130 = arith.constant 1 : index
    %291 = memref.load %arg7[%c4_129, %c1_130] : memref<6x16xf32, #tpu.memory_space<smem>>
    %292 = vector.broadcast %291 : f32 to vector<8x4xf32>
    %293 = arith.mulf %9, %292 : vector<8x4xf32>
    %294 = arith.addf %290, %293 : vector<8x4xf32>
    %c4_131 = arith.constant 4 : index
    %c2_132 = arith.constant 2 : index
    %295 = memref.load %arg7[%c4_131, %c2_132] : memref<6x16xf32, #tpu.memory_space<smem>>
    %296 = vector.broadcast %295 : f32 to vector<8x4xf32>
    %297 = arith.mulf %10, %296 : vector<8x4xf32>
    %298 = arith.addf %294, %297 : vector<8x4xf32>
    %c4_133 = arith.constant 4 : index
    %c3_134 = arith.constant 3 : index
    %299 = memref.load %arg7[%c4_133, %c3_134] : memref<6x16xf32, #tpu.memory_space<smem>>
    %300 = vector.broadcast %299 : f32 to vector<8x4xf32>
    %301 = arith.mulf %11, %300 : vector<8x4xf32>
    %302 = arith.addf %298, %301 : vector<8x4xf32>
    %c4_135 = arith.constant 4 : index
    %c4_136 = arith.constant 4 : index
    %303 = memref.load %arg7[%c4_135, %c4_136] : memref<6x16xf32, #tpu.memory_space<smem>>
    %304 = vector.broadcast %303 : f32 to vector<8x4xf32>
    %305 = arith.mulf %12, %304 : vector<8x4xf32>
    %306 = arith.addf %302, %305 : vector<8x4xf32>
    %c4_137 = arith.constant 4 : index
    %c5_138 = arith.constant 5 : index
    %307 = memref.load %arg7[%c4_137, %c5_138] : memref<6x16xf32, #tpu.memory_space<smem>>
    %308 = vector.broadcast %307 : f32 to vector<8x4xf32>
    %309 = arith.mulf %13, %308 : vector<8x4xf32>
    %310 = arith.addf %306, %309 : vector<8x4xf32>
    %c4_139 = arith.constant 4 : index
    %c6_140 = arith.constant 6 : index
    %311 = memref.load %arg7[%c4_139, %c6_140] : memref<6x16xf32, #tpu.memory_space<smem>>
    %312 = vector.broadcast %311 : f32 to vector<8x4xf32>
    %313 = arith.mulf %14, %312 : vector<8x4xf32>
    %314 = arith.addf %310, %313 : vector<8x4xf32>
    %c4_141 = arith.constant 4 : index
    %c7_142 = arith.constant 7 : index
    %315 = memref.load %arg7[%c4_141, %c7_142] : memref<6x16xf32, #tpu.memory_space<smem>>
    %316 = vector.broadcast %315 : f32 to vector<8x4xf32>
    %317 = arith.mulf %15, %316 : vector<8x4xf32>
    %318 = arith.addf %314, %317 : vector<8x4xf32>
    %c4_143 = arith.constant 4 : index
    %c8_144 = arith.constant 8 : index
    %319 = memref.load %arg7[%c4_143, %c8_144] : memref<6x16xf32, #tpu.memory_space<smem>>
    %320 = vector.broadcast %319 : f32 to vector<8x4xf32>
    %321 = arith.mulf %16, %320 : vector<8x4xf32>
    %322 = arith.addf %318, %321 : vector<8x4xf32>
    %c4_145 = arith.constant 4 : index
    %c9_146 = arith.constant 9 : index
    %323 = memref.load %arg7[%c4_145, %c9_146] : memref<6x16xf32, #tpu.memory_space<smem>>
    %324 = vector.broadcast %323 : f32 to vector<8x4xf32>
    %325 = arith.mulf %17, %324 : vector<8x4xf32>
    %326 = arith.addf %322, %325 : vector<8x4xf32>
    %c4_147 = arith.constant 4 : index
    %c10_148 = arith.constant 10 : index
    %327 = memref.load %arg7[%c4_147, %c10_148] : memref<6x16xf32, #tpu.memory_space<smem>>
    %328 = vector.broadcast %327 : f32 to vector<8x4xf32>
    %329 = arith.mulf %18, %328 : vector<8x4xf32>
    %330 = arith.addf %326, %329 : vector<8x4xf32>
    %c4_149 = arith.constant 4 : index
    %c11_150 = arith.constant 11 : index
    %331 = memref.load %arg7[%c4_149, %c11_150] : memref<6x16xf32, #tpu.memory_space<smem>>
    %332 = vector.broadcast %331 : f32 to vector<8x4xf32>
    %333 = arith.mulf %19, %332 : vector<8x4xf32>
    %334 = arith.addf %330, %333 : vector<8x4xf32>
    %c4_151 = arith.constant 4 : index
    %c12_152 = arith.constant 12 : index
    %335 = memref.load %arg7[%c4_151, %c12_152] : memref<6x16xf32, #tpu.memory_space<smem>>
    %336 = vector.broadcast %335 : f32 to vector<8x4xf32>
    %337 = arith.mulf %20, %336 : vector<8x4xf32>
    %338 = arith.addf %334, %337 : vector<8x4xf32>
    %c4_153 = arith.constant 4 : index
    %c13_154 = arith.constant 13 : index
    %339 = memref.load %arg7[%c4_153, %c13_154] : memref<6x16xf32, #tpu.memory_space<smem>>
    %340 = vector.broadcast %339 : f32 to vector<8x4xf32>
    %341 = arith.mulf %21, %340 : vector<8x4xf32>
    %342 = arith.addf %338, %341 : vector<8x4xf32>
    %c4_155 = arith.constant 4 : index
    %c14_156 = arith.constant 14 : index
    %343 = memref.load %arg7[%c4_155, %c14_156] : memref<6x16xf32, #tpu.memory_space<smem>>
    %344 = vector.broadcast %343 : f32 to vector<8x4xf32>
    %345 = arith.mulf %22, %344 : vector<8x4xf32>
    %346 = arith.addf %342, %345 : vector<8x4xf32>
    %c4_157 = arith.constant 4 : index
    %c15_158 = arith.constant 15 : index
    %347 = memref.load %arg7[%c4_157, %c15_158] : memref<6x16xf32, #tpu.memory_space<smem>>
    %348 = vector.broadcast %347 : f32 to vector<8x4xf32>
    %349 = arith.mulf %23, %348 : vector<8x4xf32>
    %350 = arith.addf %346, %349 : vector<8x4xf32>
    %c0_159 = arith.constant 0 : index
    %c4_160 = arith.constant 4 : index
    %351 = memref.load %arg8[%c0_159, %c4_160] : memref<1x6xf32, #tpu.memory_space<smem>>
    %352 = vector.broadcast %351 : f32 to vector<8x4xf32>
    %353 = arith.addf %350, %352 : vector<8x4xf32>
    %c5_161 = arith.constant 5 : index
    %c0_162 = arith.constant 0 : index
    %354 = memref.load %arg7[%c5_161, %c0_162] : memref<6x16xf32, #tpu.memory_space<smem>>
    %355 = vector.broadcast %354 : f32 to vector<8x4xf32>
    %356 = arith.mulf %8, %355 : vector<8x4xf32>
    %c5_163 = arith.constant 5 : index
    %c1_164 = arith.constant 1 : index
    %357 = memref.load %arg7[%c5_163, %c1_164] : memref<6x16xf32, #tpu.memory_space<smem>>
    %358 = vector.broadcast %357 : f32 to vector<8x4xf32>
    %359 = arith.mulf %9, %358 : vector<8x4xf32>
    %360 = arith.addf %356, %359 : vector<8x4xf32>
    %c5_165 = arith.constant 5 : index
    %c2_166 = arith.constant 2 : index
    %361 = memref.load %arg7[%c5_165, %c2_166] : memref<6x16xf32, #tpu.memory_space<smem>>
    %362 = vector.broadcast %361 : f32 to vector<8x4xf32>
    %363 = arith.mulf %10, %362 : vector<8x4xf32>
    %364 = arith.addf %360, %363 : vector<8x4xf32>
    %c5_167 = arith.constant 5 : index
    %c3_168 = arith.constant 3 : index
    %365 = memref.load %arg7[%c5_167, %c3_168] : memref<6x16xf32, #tpu.memory_space<smem>>
    %366 = vector.broadcast %365 : f32 to vector<8x4xf32>
    %367 = arith.mulf %11, %366 : vector<8x4xf32>
    %368 = arith.addf %364, %367 : vector<8x4xf32>
    %c5_169 = arith.constant 5 : index
    %c4_170 = arith.constant 4 : index
    %369 = memref.load %arg7[%c5_169, %c4_170] : memref<6x16xf32, #tpu.memory_space<smem>>
    %370 = vector.broadcast %369 : f32 to vector<8x4xf32>
    %371 = arith.mulf %12, %370 : vector<8x4xf32>
    %372 = arith.addf %368, %371 : vector<8x4xf32>
    %c5_171 = arith.constant 5 : index
    %c5_172 = arith.constant 5 : index
    %373 = memref.load %arg7[%c5_171, %c5_172] : memref<6x16xf32, #tpu.memory_space<smem>>
    %374 = vector.broadcast %373 : f32 to vector<8x4xf32>
    %375 = arith.mulf %13, %374 : vector<8x4xf32>
    %376 = arith.addf %372, %375 : vector<8x4xf32>
    %c5_173 = arith.constant 5 : index
    %c6_174 = arith.constant 6 : index
    %377 = memref.load %arg7[%c5_173, %c6_174] : memref<6x16xf32, #tpu.memory_space<smem>>
    %378 = vector.broadcast %377 : f32 to vector<8x4xf32>
    %379 = arith.mulf %14, %378 : vector<8x4xf32>
    %380 = arith.addf %376, %379 : vector<8x4xf32>
    %c5_175 = arith.constant 5 : index
    %c7_176 = arith.constant 7 : index
    %381 = memref.load %arg7[%c5_175, %c7_176] : memref<6x16xf32, #tpu.memory_space<smem>>
    %382 = vector.broadcast %381 : f32 to vector<8x4xf32>
    %383 = arith.mulf %15, %382 : vector<8x4xf32>
    %384 = arith.addf %380, %383 : vector<8x4xf32>
    %c5_177 = arith.constant 5 : index
    %c8_178 = arith.constant 8 : index
    %385 = memref.load %arg7[%c5_177, %c8_178] : memref<6x16xf32, #tpu.memory_space<smem>>
    %386 = vector.broadcast %385 : f32 to vector<8x4xf32>
    %387 = arith.mulf %16, %386 : vector<8x4xf32>
    %388 = arith.addf %384, %387 : vector<8x4xf32>
    %c5_179 = arith.constant 5 : index
    %c9_180 = arith.constant 9 : index
    %389 = memref.load %arg7[%c5_179, %c9_180] : memref<6x16xf32, #tpu.memory_space<smem>>
    %390 = vector.broadcast %389 : f32 to vector<8x4xf32>
    %391 = arith.mulf %17, %390 : vector<8x4xf32>
    %392 = arith.addf %388, %391 : vector<8x4xf32>
    %c5_181 = arith.constant 5 : index
    %c10_182 = arith.constant 10 : index
    %393 = memref.load %arg7[%c5_181, %c10_182] : memref<6x16xf32, #tpu.memory_space<smem>>
    %394 = vector.broadcast %393 : f32 to vector<8x4xf32>
    %395 = arith.mulf %18, %394 : vector<8x4xf32>
    %396 = arith.addf %392, %395 : vector<8x4xf32>
    %c5_183 = arith.constant 5 : index
    %c11_184 = arith.constant 11 : index
    %397 = memref.load %arg7[%c5_183, %c11_184] : memref<6x16xf32, #tpu.memory_space<smem>>
    %398 = vector.broadcast %397 : f32 to vector<8x4xf32>
    %399 = arith.mulf %19, %398 : vector<8x4xf32>
    %400 = arith.addf %396, %399 : vector<8x4xf32>
    %c5_185 = arith.constant 5 : index
    %c12_186 = arith.constant 12 : index
    %401 = memref.load %arg7[%c5_185, %c12_186] : memref<6x16xf32, #tpu.memory_space<smem>>
    %402 = vector.broadcast %401 : f32 to vector<8x4xf32>
    %403 = arith.mulf %20, %402 : vector<8x4xf32>
    %404 = arith.addf %400, %403 : vector<8x4xf32>
    %c5_187 = arith.constant 5 : index
    %c13_188 = arith.constant 13 : index
    %405 = memref.load %arg7[%c5_187, %c13_188] : memref<6x16xf32, #tpu.memory_space<smem>>
    %406 = vector.broadcast %405 : f32 to vector<8x4xf32>
    %407 = arith.mulf %21, %406 : vector<8x4xf32>
    %408 = arith.addf %404, %407 : vector<8x4xf32>
    %c5_189 = arith.constant 5 : index
    %c14_190 = arith.constant 14 : index
    %409 = memref.load %arg7[%c5_189, %c14_190] : memref<6x16xf32, #tpu.memory_space<smem>>
    %410 = vector.broadcast %409 : f32 to vector<8x4xf32>
    %411 = arith.mulf %22, %410 : vector<8x4xf32>
    %412 = arith.addf %408, %411 : vector<8x4xf32>
    %c5_191 = arith.constant 5 : index
    %c15_192 = arith.constant 15 : index
    %413 = memref.load %arg7[%c5_191, %c15_192] : memref<6x16xf32, #tpu.memory_space<smem>>
    %414 = vector.broadcast %413 : f32 to vector<8x4xf32>
    %415 = arith.mulf %23, %414 : vector<8x4xf32>
    %416 = arith.addf %412, %415 : vector<8x4xf32>
    %c0_193 = arith.constant 0 : index
    %c5_194 = arith.constant 5 : index
    %417 = memref.load %arg8[%c0_193, %c5_194] : memref<1x6xf32, #tpu.memory_space<smem>>
    %418 = vector.broadcast %417 : f32 to vector<8x4xf32>
    %419 = arith.addf %416, %418 : vector<8x4xf32>
    %420 = tpu.concatenate %89, %155, %221, %287, %353, %419 in 0 : vector<8x4xf32>, vector<8x4xf32>, vector<8x4xf32>, vector<8x4xf32>, vector<8x4xf32>, vector<8x4xf32> -> vector<48x4xf32>
    %c0_195 = arith.constant 0 : index
    %c0_196 = arith.constant 0 : index
    %421 = vector.load %arg4[%c0_195, %c0_196] : memref<4x16xf32, #tpu.memory_space<vmem>>, vector<4x16xf32>
    %cst_197 = arith.constant dense<0.000000e+00> : vector<48x16xf32>
    %422 = tpu.matmul %420, %421, %cst_197 {dimension_numbers = #tpu.dot_dimension_numbers<[1], [0], [0], [1], [0, 0, 1, 1], [], []>} : vector<48x4xf32>, vector<4x16xf32>, vector<48x16xf32> -> vector<48x16xf32>
    %423 = arith.negf %422 : vector<48x16xf32>
    %424 = math.exp %423 : vector<48x16xf32>
    %cst_198 = arith.constant 1.000000e+00 : f32
    %425 = vector.broadcast %cst_198 : f32 to vector<48x16xf32>
    %426 = arith.addf %425, %424 : vector<48x16xf32>
    %427 = arith.divf %425, %426 : vector<48x16xf32>
    %428 = vector.extract_strided_slice %427 {offsets = [0, 0], sizes = [8, 16], strides = [1, 1]} : vector<48x16xf32> to vector<8x16xf32>
    %429 = vector.extract_strided_slice %427 {offsets = [8, 0], sizes = [8, 16], strides = [1, 1]} : vector<48x16xf32> to vector<8x16xf32>
    %430 = vector.extract_strided_slice %427 {offsets = [16, 0], sizes = [8, 16], strides = [1, 1]} : vector<48x16xf32> to vector<8x16xf32>
    %431 = vector.extract_strided_slice %427 {offsets = [24, 0], sizes = [8, 16], strides = [1, 1]} : vector<48x16xf32> to vector<8x16xf32>
    %432 = vector.extract_strided_slice %427 {offsets = [32, 0], sizes = [8, 16], strides = [1, 1]} : vector<48x16xf32> to vector<8x16xf32>
    %433 = vector.extract_strided_slice %427 {offsets = [40, 0], sizes = [8, 16], strides = [1, 1]} : vector<48x16xf32> to vector<8x16xf32>
    %c0_199 = arith.constant 0 : index
    %c0_200 = arith.constant 0 : index
    %434 = memref.load %arg9[%c0_199, %c0_200] : memref<6x6xf32, #tpu.memory_space<smem>>
    %435 = vector.broadcast %434 : f32 to vector<8x16xf32>
    %436 = arith.mulf %428, %435 : vector<8x16xf32>
    %c0_201 = arith.constant 0 : index
    %c1_202 = arith.constant 1 : index
    %437 = memref.load %arg9[%c0_201, %c1_202] : memref<6x6xf32, #tpu.memory_space<smem>>
    %438 = vector.broadcast %437 : f32 to vector<8x16xf32>
    %439 = arith.mulf %429, %438 : vector<8x16xf32>
    %440 = arith.addf %436, %439 : vector<8x16xf32>
    %c0_203 = arith.constant 0 : index
    %c2_204 = arith.constant 2 : index
    %441 = memref.load %arg9[%c0_203, %c2_204] : memref<6x6xf32, #tpu.memory_space<smem>>
    %442 = vector.broadcast %441 : f32 to vector<8x16xf32>
    %443 = arith.mulf %430, %442 : vector<8x16xf32>
    %444 = arith.addf %440, %443 : vector<8x16xf32>
    %c0_205 = arith.constant 0 : index
    %c3_206 = arith.constant 3 : index
    %445 = memref.load %arg9[%c0_205, %c3_206] : memref<6x6xf32, #tpu.memory_space<smem>>
    %446 = vector.broadcast %445 : f32 to vector<8x16xf32>
    %447 = arith.mulf %431, %446 : vector<8x16xf32>
    %448 = arith.addf %444, %447 : vector<8x16xf32>
    %c0_207 = arith.constant 0 : index
    %c4_208 = arith.constant 4 : index
    %449 = memref.load %arg9[%c0_207, %c4_208] : memref<6x6xf32, #tpu.memory_space<smem>>
    %450 = vector.broadcast %449 : f32 to vector<8x16xf32>
    %451 = arith.mulf %432, %450 : vector<8x16xf32>
    %452 = arith.addf %448, %451 : vector<8x16xf32>
    %c0_209 = arith.constant 0 : index
    %c5_210 = arith.constant 5 : index
    %453 = memref.load %arg9[%c0_209, %c5_210] : memref<6x6xf32, #tpu.memory_space<smem>>
    %454 = vector.broadcast %453 : f32 to vector<8x16xf32>
    %455 = arith.mulf %433, %454 : vector<8x16xf32>
    %456 = arith.addf %452, %455 : vector<8x16xf32>
    %c0_211 = arith.constant 0 : index
    %c0_212 = arith.constant 0 : index
    %457 = memref.load %arg10[%c0_211, %c0_212] : memref<1x6xf32, #tpu.memory_space<smem>>
    %458 = vector.broadcast %457 : f32 to vector<8x16xf32>
    %459 = arith.addf %456, %458 : vector<8x16xf32>
    %c1_213 = arith.constant 1 : index
    %c0_214 = arith.constant 0 : index
    %460 = memref.load %arg9[%c1_213, %c0_214] : memref<6x6xf32, #tpu.memory_space<smem>>
    %461 = vector.broadcast %460 : f32 to vector<8x16xf32>
    %462 = arith.mulf %428, %461 : vector<8x16xf32>
    %c1_215 = arith.constant 1 : index
    %c1_216 = arith.constant 1 : index
    %463 = memref.load %arg9[%c1_215, %c1_216] : memref<6x6xf32, #tpu.memory_space<smem>>
    %464 = vector.broadcast %463 : f32 to vector<8x16xf32>
    %465 = arith.mulf %429, %464 : vector<8x16xf32>
    %466 = arith.addf %462, %465 : vector<8x16xf32>
    %c1_217 = arith.constant 1 : index
    %c2_218 = arith.constant 2 : index
    %467 = memref.load %arg9[%c1_217, %c2_218] : memref<6x6xf32, #tpu.memory_space<smem>>
    %468 = vector.broadcast %467 : f32 to vector<8x16xf32>
    %469 = arith.mulf %430, %468 : vector<8x16xf32>
    %470 = arith.addf %466, %469 : vector<8x16xf32>
    %c1_219 = arith.constant 1 : index
    %c3_220 = arith.constant 3 : index
    %471 = memref.load %arg9[%c1_219, %c3_220] : memref<6x6xf32, #tpu.memory_space<smem>>
    %472 = vector.broadcast %471 : f32 to vector<8x16xf32>
    %473 = arith.mulf %431, %472 : vector<8x16xf32>
    %474 = arith.addf %470, %473 : vector<8x16xf32>
    %c1_221 = arith.constant 1 : index
    %c4_222 = arith.constant 4 : index
    %475 = memref.load %arg9[%c1_221, %c4_222] : memref<6x6xf32, #tpu.memory_space<smem>>
    %476 = vector.broadcast %475 : f32 to vector<8x16xf32>
    %477 = arith.mulf %432, %476 : vector<8x16xf32>
    %478 = arith.addf %474, %477 : vector<8x16xf32>
    %c1_223 = arith.constant 1 : index
    %c5_224 = arith.constant 5 : index
    %479 = memref.load %arg9[%c1_223, %c5_224] : memref<6x6xf32, #tpu.memory_space<smem>>
    %480 = vector.broadcast %479 : f32 to vector<8x16xf32>
    %481 = arith.mulf %433, %480 : vector<8x16xf32>
    %482 = arith.addf %478, %481 : vector<8x16xf32>
    %c0_225 = arith.constant 0 : index
    %c1_226 = arith.constant 1 : index
    %483 = memref.load %arg10[%c0_225, %c1_226] : memref<1x6xf32, #tpu.memory_space<smem>>
    %484 = vector.broadcast %483 : f32 to vector<8x16xf32>
    %485 = arith.addf %482, %484 : vector<8x16xf32>
    %c2_227 = arith.constant 2 : index
    %c0_228 = arith.constant 0 : index
    %486 = memref.load %arg9[%c2_227, %c0_228] : memref<6x6xf32, #tpu.memory_space<smem>>
    %487 = vector.broadcast %486 : f32 to vector<8x16xf32>
    %488 = arith.mulf %428, %487 : vector<8x16xf32>
    %c2_229 = arith.constant 2 : index
    %c1_230 = arith.constant 1 : index
    %489 = memref.load %arg9[%c2_229, %c1_230] : memref<6x6xf32, #tpu.memory_space<smem>>
    %490 = vector.broadcast %489 : f32 to vector<8x16xf32>
    %491 = arith.mulf %429, %490 : vector<8x16xf32>
    %492 = arith.addf %488, %491 : vector<8x16xf32>
    %c2_231 = arith.constant 2 : index
    %c2_232 = arith.constant 2 : index
    %493 = memref.load %arg9[%c2_231, %c2_232] : memref<6x6xf32, #tpu.memory_space<smem>>
    %494 = vector.broadcast %493 : f32 to vector<8x16xf32>
    %495 = arith.mulf %430, %494 : vector<8x16xf32>
    %496 = arith.addf %492, %495 : vector<8x16xf32>
    %c2_233 = arith.constant 2 : index
    %c3_234 = arith.constant 3 : index
    %497 = memref.load %arg9[%c2_233, %c3_234] : memref<6x6xf32, #tpu.memory_space<smem>>
    %498 = vector.broadcast %497 : f32 to vector<8x16xf32>
    %499 = arith.mulf %431, %498 : vector<8x16xf32>
    %500 = arith.addf %496, %499 : vector<8x16xf32>
    %c2_235 = arith.constant 2 : index
    %c4_236 = arith.constant 4 : index
    %501 = memref.load %arg9[%c2_235, %c4_236] : memref<6x6xf32, #tpu.memory_space<smem>>
    %502 = vector.broadcast %501 : f32 to vector<8x16xf32>
    %503 = arith.mulf %432, %502 : vector<8x16xf32>
    %504 = arith.addf %500, %503 : vector<8x16xf32>
    %c2_237 = arith.constant 2 : index
    %c5_238 = arith.constant 5 : index
    %505 = memref.load %arg9[%c2_237, %c5_238] : memref<6x6xf32, #tpu.memory_space<smem>>
    %506 = vector.broadcast %505 : f32 to vector<8x16xf32>
    %507 = arith.mulf %433, %506 : vector<8x16xf32>
    %508 = arith.addf %504, %507 : vector<8x16xf32>
    %c0_239 = arith.constant 0 : index
    %c2_240 = arith.constant 2 : index
    %509 = memref.load %arg10[%c0_239, %c2_240] : memref<1x6xf32, #tpu.memory_space<smem>>
    %510 = vector.broadcast %509 : f32 to vector<8x16xf32>
    %511 = arith.addf %508, %510 : vector<8x16xf32>
    %c3_241 = arith.constant 3 : index
    %c0_242 = arith.constant 0 : index
    %512 = memref.load %arg9[%c3_241, %c0_242] : memref<6x6xf32, #tpu.memory_space<smem>>
    %513 = vector.broadcast %512 : f32 to vector<8x16xf32>
    %514 = arith.mulf %428, %513 : vector<8x16xf32>
    %c3_243 = arith.constant 3 : index
    %c1_244 = arith.constant 1 : index
    %515 = memref.load %arg9[%c3_243, %c1_244] : memref<6x6xf32, #tpu.memory_space<smem>>
    %516 = vector.broadcast %515 : f32 to vector<8x16xf32>
    %517 = arith.mulf %429, %516 : vector<8x16xf32>
    %518 = arith.addf %514, %517 : vector<8x16xf32>
    %c3_245 = arith.constant 3 : index
    %c2_246 = arith.constant 2 : index
    %519 = memref.load %arg9[%c3_245, %c2_246] : memref<6x6xf32, #tpu.memory_space<smem>>
    %520 = vector.broadcast %519 : f32 to vector<8x16xf32>
    %521 = arith.mulf %430, %520 : vector<8x16xf32>
    %522 = arith.addf %518, %521 : vector<8x16xf32>
    %c3_247 = arith.constant 3 : index
    %c3_248 = arith.constant 3 : index
    %523 = memref.load %arg9[%c3_247, %c3_248] : memref<6x6xf32, #tpu.memory_space<smem>>
    %524 = vector.broadcast %523 : f32 to vector<8x16xf32>
    %525 = arith.mulf %431, %524 : vector<8x16xf32>
    %526 = arith.addf %522, %525 : vector<8x16xf32>
    %c3_249 = arith.constant 3 : index
    %c4_250 = arith.constant 4 : index
    %527 = memref.load %arg9[%c3_249, %c4_250] : memref<6x6xf32, #tpu.memory_space<smem>>
    %528 = vector.broadcast %527 : f32 to vector<8x16xf32>
    %529 = arith.mulf %432, %528 : vector<8x16xf32>
    %530 = arith.addf %526, %529 : vector<8x16xf32>
    %c3_251 = arith.constant 3 : index
    %c5_252 = arith.constant 5 : index
    %531 = memref.load %arg9[%c3_251, %c5_252] : memref<6x6xf32, #tpu.memory_space<smem>>
    %532 = vector.broadcast %531 : f32 to vector<8x16xf32>
    %533 = arith.mulf %433, %532 : vector<8x16xf32>
    %534 = arith.addf %530, %533 : vector<8x16xf32>
    %c0_253 = arith.constant 0 : index
    %c3_254 = arith.constant 3 : index
    %535 = memref.load %arg10[%c0_253, %c3_254] : memref<1x6xf32, #tpu.memory_space<smem>>
    %536 = vector.broadcast %535 : f32 to vector<8x16xf32>
    %537 = arith.addf %534, %536 : vector<8x16xf32>
    %c4_255 = arith.constant 4 : index
    %c0_256 = arith.constant 0 : index
    %538 = memref.load %arg9[%c4_255, %c0_256] : memref<6x6xf32, #tpu.memory_space<smem>>
    %539 = vector.broadcast %538 : f32 to vector<8x16xf32>
    %540 = arith.mulf %428, %539 : vector<8x16xf32>
    %c4_257 = arith.constant 4 : index
    %c1_258 = arith.constant 1 : index
    %541 = memref.load %arg9[%c4_257, %c1_258] : memref<6x6xf32, #tpu.memory_space<smem>>
    %542 = vector.broadcast %541 : f32 to vector<8x16xf32>
    %543 = arith.mulf %429, %542 : vector<8x16xf32>
    %544 = arith.addf %540, %543 : vector<8x16xf32>
    %c4_259 = arith.constant 4 : index
    %c2_260 = arith.constant 2 : index
    %545 = memref.load %arg9[%c4_259, %c2_260] : memref<6x6xf32, #tpu.memory_space<smem>>
    %546 = vector.broadcast %545 : f32 to vector<8x16xf32>
    %547 = arith.mulf %430, %546 : vector<8x16xf32>
    %548 = arith.addf %544, %547 : vector<8x16xf32>
    %c4_261 = arith.constant 4 : index
    %c3_262 = arith.constant 3 : index
    %549 = memref.load %arg9[%c4_261, %c3_262] : memref<6x6xf32, #tpu.memory_space<smem>>
    %550 = vector.broadcast %549 : f32 to vector<8x16xf32>
    %551 = arith.mulf %431, %550 : vector<8x16xf32>
    %552 = arith.addf %548, %551 : vector<8x16xf32>
    %c4_263 = arith.constant 4 : index
    %c4_264 = arith.constant 4 : index
    %553 = memref.load %arg9[%c4_263, %c4_264] : memref<6x6xf32, #tpu.memory_space<smem>>
    %554 = vector.broadcast %553 : f32 to vector<8x16xf32>
    %555 = arith.mulf %432, %554 : vector<8x16xf32>
    %556 = arith.addf %552, %555 : vector<8x16xf32>
    %c4_265 = arith.constant 4 : index
    %c5_266 = arith.constant 5 : index
    %557 = memref.load %arg9[%c4_265, %c5_266] : memref<6x6xf32, #tpu.memory_space<smem>>
    %558 = vector.broadcast %557 : f32 to vector<8x16xf32>
    %559 = arith.mulf %433, %558 : vector<8x16xf32>
    %560 = arith.addf %556, %559 : vector<8x16xf32>
    %c0_267 = arith.constant 0 : index
    %c4_268 = arith.constant 4 : index
    %561 = memref.load %arg10[%c0_267, %c4_268] : memref<1x6xf32, #tpu.memory_space<smem>>
    %562 = vector.broadcast %561 : f32 to vector<8x16xf32>
    %563 = arith.addf %560, %562 : vector<8x16xf32>
    %c5_269 = arith.constant 5 : index
    %c0_270 = arith.constant 0 : index
    %564 = memref.load %arg9[%c5_269, %c0_270] : memref<6x6xf32, #tpu.memory_space<smem>>
    %565 = vector.broadcast %564 : f32 to vector<8x16xf32>
    %566 = arith.mulf %428, %565 : vector<8x16xf32>
    %c5_271 = arith.constant 5 : index
    %c1_272 = arith.constant 1 : index
    %567 = memref.load %arg9[%c5_271, %c1_272] : memref<6x6xf32, #tpu.memory_space<smem>>
    %568 = vector.broadcast %567 : f32 to vector<8x16xf32>
    %569 = arith.mulf %429, %568 : vector<8x16xf32>
    %570 = arith.addf %566, %569 : vector<8x16xf32>
    %c5_273 = arith.constant 5 : index
    %c2_274 = arith.constant 2 : index
    %571 = memref.load %arg9[%c5_273, %c2_274] : memref<6x6xf32, #tpu.memory_space<smem>>
    %572 = vector.broadcast %571 : f32 to vector<8x16xf32>
    %573 = arith.mulf %430, %572 : vector<8x16xf32>
    %574 = arith.addf %570, %573 : vector<8x16xf32>
    %c5_275 = arith.constant 5 : index
    %c3_276 = arith.constant 3 : index
    %575 = memref.load %arg9[%c5_275, %c3_276] : memref<6x6xf32, #tpu.memory_space<smem>>
    %576 = vector.broadcast %575 : f32 to vector<8x16xf32>
    %577 = arith.mulf %431, %576 : vector<8x16xf32>
    %578 = arith.addf %574, %577 : vector<8x16xf32>
    %c5_277 = arith.constant 5 : index
    %c4_278 = arith.constant 4 : index
    %579 = memref.load %arg9[%c5_277, %c4_278] : memref<6x6xf32, #tpu.memory_space<smem>>
    %580 = vector.broadcast %579 : f32 to vector<8x16xf32>
    %581 = arith.mulf %432, %580 : vector<8x16xf32>
    %582 = arith.addf %578, %581 : vector<8x16xf32>
    %c5_279 = arith.constant 5 : index
    %c5_280 = arith.constant 5 : index
    %583 = memref.load %arg9[%c5_279, %c5_280] : memref<6x6xf32, #tpu.memory_space<smem>>
    %584 = vector.broadcast %583 : f32 to vector<8x16xf32>
    %585 = arith.mulf %433, %584 : vector<8x16xf32>
    %586 = arith.addf %582, %585 : vector<8x16xf32>
    %c0_281 = arith.constant 0 : index
    %c5_282 = arith.constant 5 : index
    %587 = memref.load %arg10[%c0_281, %c5_282] : memref<1x6xf32, #tpu.memory_space<smem>>
    %588 = vector.broadcast %587 : f32 to vector<8x16xf32>
    %589 = arith.addf %586, %588 : vector<8x16xf32>
    %590 = tpu.concatenate %459, %485, %511, %537, %563, %589 in 0 : vector<8x16xf32>, vector<8x16xf32>, vector<8x16xf32>, vector<8x16xf32>, vector<8x16xf32>, vector<8x16xf32> -> vector<48x16xf32>
    %c0_283 = arith.constant 0 : index
    %c0_284 = arith.constant 0 : index
    %591 = vector.load %arg5[%c0_283, %c0_284] : memref<16x64xf32, #tpu.memory_space<vmem>>, vector<16x64xf32>
    %cst_285 = arith.constant dense<0.000000e+00> : vector<48x64xf32>
    %592 = tpu.matmul %590, %591, %cst_285 {dimension_numbers = #tpu.dot_dimension_numbers<[1], [0], [0], [1], [0, 0, 1, 1], [], []>} : vector<48x16xf32>, vector<16x64xf32>, vector<48x64xf32> -> vector<48x64xf32>
    %593 = arith.negf %592 : vector<48x64xf32>
    %594 = math.exp %593 : vector<48x64xf32>
    %cst_286 = arith.constant 1.000000e+00 : f32
    %595 = vector.broadcast %cst_286 : f32 to vector<48x64xf32>
    %596 = arith.addf %595, %594 : vector<48x64xf32>
    %597 = arith.divf %595, %596 : vector<48x64xf32>
    %598 = vector.extract_strided_slice %597 {offsets = [0, 0], sizes = [8, 64], strides = [1, 1]} : vector<48x64xf32> to vector<8x64xf32>
    %599 = vector.extract_strided_slice %597 {offsets = [8, 0], sizes = [8, 64], strides = [1, 1]} : vector<48x64xf32> to vector<8x64xf32>
    %600 = vector.extract_strided_slice %597 {offsets = [16, 0], sizes = [8, 64], strides = [1, 1]} : vector<48x64xf32> to vector<8x64xf32>
    %601 = vector.extract_strided_slice %597 {offsets = [24, 0], sizes = [8, 64], strides = [1, 1]} : vector<48x64xf32> to vector<8x64xf32>
    %602 = vector.extract_strided_slice %597 {offsets = [32, 0], sizes = [8, 64], strides = [1, 1]} : vector<48x64xf32> to vector<8x64xf32>
    %603 = vector.extract_strided_slice %597 {offsets = [40, 0], sizes = [8, 64], strides = [1, 1]} : vector<48x64xf32> to vector<8x64xf32>
    %c0_287 = arith.constant 0 : index
    %c0_288 = arith.constant 0 : index
    %604 = memref.load %arg11[%c0_287, %c0_288] : memref<1x6xf32, #tpu.memory_space<smem>>
    %605 = vector.broadcast %604 : f32 to vector<8x64xf32>
    %606 = arith.mulf %598, %605 : vector<8x64xf32>
    %c0_289 = arith.constant 0 : index
    %c1_290 = arith.constant 1 : index
    %607 = memref.load %arg11[%c0_289, %c1_290] : memref<1x6xf32, #tpu.memory_space<smem>>
    %608 = vector.broadcast %607 : f32 to vector<8x64xf32>
    %609 = arith.mulf %599, %608 : vector<8x64xf32>
    %610 = arith.addf %606, %609 : vector<8x64xf32>
    %c0_291 = arith.constant 0 : index
    %c2_292 = arith.constant 2 : index
    %611 = memref.load %arg11[%c0_291, %c2_292] : memref<1x6xf32, #tpu.memory_space<smem>>
    %612 = vector.broadcast %611 : f32 to vector<8x64xf32>
    %613 = arith.mulf %600, %612 : vector<8x64xf32>
    %614 = arith.addf %610, %613 : vector<8x64xf32>
    %c0_293 = arith.constant 0 : index
    %c3_294 = arith.constant 3 : index
    %615 = memref.load %arg11[%c0_293, %c3_294] : memref<1x6xf32, #tpu.memory_space<smem>>
    %616 = vector.broadcast %615 : f32 to vector<8x64xf32>
    %617 = arith.mulf %601, %616 : vector<8x64xf32>
    %618 = arith.addf %614, %617 : vector<8x64xf32>
    %c0_295 = arith.constant 0 : index
    %c4_296 = arith.constant 4 : index
    %619 = memref.load %arg11[%c0_295, %c4_296] : memref<1x6xf32, #tpu.memory_space<smem>>
    %620 = vector.broadcast %619 : f32 to vector<8x64xf32>
    %621 = arith.mulf %602, %620 : vector<8x64xf32>
    %622 = arith.addf %618, %621 : vector<8x64xf32>
    %c0_297 = arith.constant 0 : index
    %c5_298 = arith.constant 5 : index
    %623 = memref.load %arg11[%c0_297, %c5_298] : memref<1x6xf32, #tpu.memory_space<smem>>
    %624 = vector.broadcast %623 : f32 to vector<8x64xf32>
    %625 = arith.mulf %603, %624 : vector<8x64xf32>
    %626 = arith.addf %622, %625 : vector<8x64xf32>
    %c0_299 = arith.constant 0 : index
    %c0_300 = arith.constant 0 : index
    %627 = memref.load %arg12[%c0_299, %c0_300] : memref<1x1xf32, #tpu.memory_space<smem>>
    %628 = vector.broadcast %627 : f32 to vector<8x64xf32>
    %629 = arith.addf %626, %628 : vector<8x64xf32>
    %c0_301 = arith.constant 0 : index
    %c0_302 = arith.constant 0 : index
    %630 = vector.load %arg6[%c0_301, %c0_302] : memref<64x256xf32, #tpu.memory_space<vmem>>, vector<64x256xf32>
    %cst_303 = arith.constant dense<0.000000e+00> : vector<8x256xf32>
    %631 = tpu.matmul %629, %630, %cst_303 {dimension_numbers = #tpu.dot_dimension_numbers<[1], [0], [0], [1], [0, 0, 1, 1], [], []>} : vector<8x64xf32>, vector<64x256xf32>, vector<8x256xf32> -> vector<8x256xf32>
    %632 = arith.negf %631 : vector<8x256xf32>
    %633 = math.exp %632 : vector<8x256xf32>
    %cst_304 = arith.constant 1.000000e+00 : f32
    %634 = vector.broadcast %cst_304 : f32 to vector<8x256xf32>
    %635 = arith.addf %634, %633 : vector<8x256xf32>
    %636 = arith.divf %634, %635 : vector<8x256xf32>
    %cst_305 = arith.constant 2.550000e+02 : f32
    %637 = vector.broadcast %cst_305 : f32 to vector<8x256xf32>
    %638 = arith.mulf %636, %637 : vector<8x256xf32>
    %c0_306 = arith.constant 0 : index
    %c0_307 = arith.constant 0 : index
    %c0_308 = arith.constant 0 : index
    %639 = vector.load %arg13[%c0_306, %c0_307, %c0_308] : memref<8x1x256xf32, #tpu.memory_space<vmem>>, vector<8x1x256xf32>
    %640 = vector.shape_cast %639 : vector<8x1x256xf32> to vector<8x256xf32>
    %641 = vector.shape_cast %638 : vector<8x256xf32> to vector<8x1x256xf32>
    tpu.vector_store %arg13[%c0_306, %c0_307, %c0_308], %641 {strides = array<i32>} : memref<8x1x256xf32, #tpu.memory_space<vmem>>, vector<8x1x256xf32>,
    return
  }
  func.func @transform_0(%arg0: i32) -> (i32, i32) {
    %c0_i32 = arith.constant 0 : i32
    %c0_i32_0 = arith.constant 0 : i32
    return %arg0, %c0_i32 : i32, i32
  }
  func.func @transform_1(%arg0: i32) -> (i32, i32) {
    %c0_i32 = arith.constant 0 : i32
    %c0_i32_0 = arith.constant 0 : i32
    %c0_i32_1 = arith.constant 0 : i32
    return %c0_i32, %c0_i32_0 : i32, i32
  }
  func.func @transform_2(%arg0: i32) -> (i32, i32) {
    %c0_i32 = arith.constant 0 : i32
    %c0_i32_0 = arith.constant 0 : i32
    %c0_i32_1 = arith.constant 0 : i32
    return %c0_i32, %c0_i32_0 : i32, i32
  }
  func.func @transform_3(%arg0: i32) -> (i32, i32) {
    %c0_i32 = arith.constant 0 : i32
    %c0_i32_0 = arith.constant 0 : i32
    %c0_i32_1 = arith.constant 0 : i32
    return %c0_i32, %c0_i32_0 : i32, i32
  }
  func.func @transform_4(%arg0: i32) -> (i32, i32) {
    %c0_i32 = arith.constant 0 : i32
    %c0_i32_0 = arith.constant 0 : i32
    %c0_i32_1 = arith.constant 0 : i32
    return %c0_i32, %c0_i32_0 : i32, i32
  }
  func.func @transform_5(%arg0: i32) -> (i32, i32) {
    %c0_i32 = arith.constant 0 : i32
    %c0_i32_0 = arith.constant 0 : i32
    %c0_i32_1 = arith.constant 0 : i32
    return %c0_i32, %c0_i32_0 : i32, i32
  }
  func.func @transform_6(%arg0: i32) -> (i32, i32) {
    %c0_i32 = arith.constant 0 : i32
    %c0_i32_0 = arith.constant 0 : i32
    %c0_i32_1 = arith.constant 0 : i32
    return %c0_i32, %c0_i32_0 : i32, i32
  }
  func.func @transform_7(%arg0: i32) -> (i32, i32) {
    %c0_i32 = arith.constant 0 : i32
    %c0_i32_0 = arith.constant 0 : i32
    %c0_i32_1 = arith.constant 0 : i32
    return %c0_i32, %c0_i32_0 : i32, i32
  }
  func.func @transform_8(%arg0: i32) -> (i32, i32) {
    %c0_i32 = arith.constant 0 : i32
    %c0_i32_0 = arith.constant 0 : i32
    %c0_i32_1 = arith.constant 0 : i32
    return %c0_i32, %c0_i32_0 : i32, i32
  }
  func.func @transform_9(%arg0: i32) -> (i32, i32) {
    %c0_i32 = arith.constant 0 : i32
    %c0_i32_0 = arith.constant 0 : i32
    %c0_i32_1 = arith.constant 0 : i32
    return %c0_i32, %c0_i32_0 : i32, i32
  }
  func.func @transform_10(%arg0: i32) -> (i32, i32) {
    %c0_i32 = arith.constant 0 : i32
    %c0_i32_0 = arith.constant 0 : i32
    %c0_i32_1 = arith.constant 0 : i32
    return %c0_i32, %c0_i32_0 : i32, i32
  }
  func.func @transform_11(%arg0: i32) -> (i32, i32) {
    %c0_i32 = arith.constant 0 : i32
    %c0_i32_0 = arith.constant 0 : i32
    %c0_i32_1 = arith.constant 0 : i32
    return %c0_i32, %c0_i32_0 : i32, i32
  }
  func.func @transform_12(%arg0: i32) -> (i32, i32, i32) {
    %c0_i32 = arith.constant 0 : i32
    %c0_i32_0 = arith.constant 0 : i32
    %c0_i32_1 = arith.constant 0 : i32
    return %arg0, %c0_i32, %c0_i32_0 : i32, i32, i32
  }
}

</mosaic_0001>

<llo_original>
// kernel: apply.1
$region0: #{apply.1}
  #allocation0 [shape = 'u32[]', space=smem, size = 0x4, offset = 0x4, fixed_abs, tag = 'smem constant byte address 0x4 - core index']
  #allocation1 [shape = 'u32[144,128]{1,0:T(1,128)}', space=vmem, size = 0x12000, scoped, tag = 'internal scratch']
  #allocation2 [shape = 'f32[1,1]{1,0:T(1,128)S(6)}', space=smem, size = 0x200, scoped, tag = 'scoped memory for apply.1']
  %s0 = inlined_call_operand.vmem [shape: f32[8,16], index: 0, kind: input, shape index: {}]
  %s1 = inlined_call_operand.hbm [shape: f32[16,64], index: 1, kind: input, shape index: {}]
  %s2 = inlined_call_operand.hbm [shape: f32[1,64], index: 2, kind: input, shape index: {}]
  %s3 = inlined_call_operand.hbm [shape: f32[4,16], index: 3, kind: input, shape index: {}]
  %s4 = inlined_call_operand.vmem [shape: f32[16,64], index: 4, kind: input, shape index: {}]
  %s5 = inlined_call_operand.hbm [shape: f32[64,256], index: 5, kind: input, shape index: {}]
  %s6 = inlined_call_operand.vmem [shape: f32[6,16], index: 6, kind: input, shape index: {}]
  %s7 = inlined_call_operand.vmem [shape: f32[1,6], index: 7, kind: input, shape index: {}]
  %s8 = inlined_call_operand.vmem [shape: f32[6,6], index: 8, kind: input, shape index: {}]
  %s9 = inlined_call_operand.vmem [shape: f32[1,6], index: 9, kind: input, shape index: {}]
  %s10 = inlined_call_operand.vmem [shape: f32[1,6], index: 10, kind: input, shape index: {}]
  %s11 = inlined_call_operand.<no memory space> [shape: f32[1,1], index: 11, kind: input, shape index: {}]
  %s12 = inlined_call_operand.vmem [shape: f32[8,1,256], index: 12, kind: output, shape index: {}]
  %s13 = sld [smem:[#allocation0]]
  $region94: #{apply.1} parent=0
    _
  %s15 = ssub.s32 1, %s13
  %s16 = scalar_select 0, %s15, %s13
  %17 = sst [smem:[#allocation2]] %s11
  $region1: #{apply.1} parent=0
    #allocation3 [shape = 'u8[8192]{0}', space=vmem, size = 0x2000, scoped, tag = 'input window, operand 1, single buffered']
    #allocation4 [shape = 's32[1]{0}', space=sflag, size = 0x4, scoped, tag = 'scoped memory for apply.1']
    #allocation5 [shape = 's32[1]{0}', space=sflag, size = 0x4, scoped, tag = 'scoped memory for apply.1']
    #allocation6 [shape = 'u8[512]{0}', space=vmem, size = 0x400, scoped, tag = 'input window, operand 2, single buffered']
    #allocation7 [shape = 's32[1]{0}', space=sflag, size = 0x4, scoped, tag = 'scoped memory for apply.1']
    #allocation8 [shape = 'u8[2048]{0}', space=vmem, size = 0x800, scoped, tag = 'input window, operand 3, single buffered']
    #allocation9 [shape = 'u8[65536]{0}', space=vmem, size = 0x10000, scoped, tag = 'input window, operand 5, single buffered']
    #allocation10 [shape = 's32[1]{0}', space=sflag, size = 0x4, scoped, tag = 'scoped memory for apply.1']
    #allocation11 [shape = 'u8[4096]{0}', space=smem, size = 0x1000, scoped, tag = 'input window, operand 6, single buffered']
    #allocation12 [shape = 'u8[512]{0}', space=smem, size = 0x200, scoped, tag = 'input window, operand 7, single buffered']
    #allocation13 [shape = 's32[1]{0}', space=sflag, size = 0x4, scoped, tag = 'scoped memory for apply.1']
    #allocation14 [shape = 'u8[4096]{0}', space=smem, size = 0x1000, scoped, tag = 'input window, operand 8, single buffered']
    #allocation15 [shape = 'u8[512]{0}', space=smem, size = 0x200, scoped, tag = 'input window, operand 9, single buffered']
    #allocation16 [shape = 's32[1]{0}', space=sflag, size = 0x4, scoped, tag = 'scoped memory for apply.1']
    #allocation17 [shape = 'u8[512]{0}', space=smem, size = 0x200, scoped, tag = 'input window, operand 10, single buffered']
    %18 = vsyncpa [#allocation4], 0
    %19 = vsyncpa [#allocation7], 0
    %20 = vsyncpa [#allocation10], 0
    %21 = vsyncpa [#allocation5], 0
    %22 = vsyncpa [#allocation13], 0
    %23 = vsyncpa [#allocation16], 0
    // Predicated region
    $region2: #{apply.1} parent=1 // pred_check
      _
    $region3: #{apply.1} parent=1 // pred_check_branch
      %25 = sbr.rel (0) target = $region5
    $region4: #{apply.1} parent=1 // pred_region
      _
    $region5: #{apply.1} parent=1 // pred_fallthru
      _
    // Predicated region
    $region6: #{apply.1} parent=1 // pred_check
      _
    $region7: #{apply.1} parent=1 // pred_check_branch
      %27 = sbr.rel (0) target = $region9
    $region8: #{apply.1} parent=1 // pred_region
      %s29 = ssub.s32 256, 256
      %30 = vsyncadd [#allocation4], %s29
      %s31 = sshll.u32 [#allocation3], 4
      %s32 = int_to_ptr.vmem [resolvable:$true] %s31
      %37 = dma.hbm_to_vmem [thread:$0]  %s1, 256, %s32, [#allocation4], 128, 128, 8
    $region9: #{apply.1} parent=1 // pred_fallthru
      _
    // Predicated region
    $region10: #{apply.1} parent=1 // pred_check
      _
    $region11: #{apply.1} parent=1 // pred_check_branch
      %39 = sbr.rel (0) target = $region13
    $region12: #{apply.1} parent=1 // pred_region
      %s41 = ssub.s32 16, 16
      %42 = vsyncadd [#allocation7], %s41
      %s44 = sshll.u32 [#allocation6], 4
      %s45 = int_to_ptr.vmem [resolvable:$true] %s44
      %47 = dma.hbm_to_vmem [thread:$0]  %s2, 16, %s45, [#allocation7]
    $region13: #{apply.1} parent=1 // pred_fallthru
      _
    // Predicated region
    $region14: #{apply.1} parent=1 // pred_check
      _
    $region15: #{apply.1} parent=1 // pred_check_branch
      %49 = sbr.rel (0) target = $region17
    $region16: #{apply.1} parent=1 // pred_region
      %s51 = ssub.s32 64, 64
      %52 = vsyncadd [#allocation7], %s51
      %s54 = sshll.u32 [#allocation8], 4
      %s55 = int_to_ptr.vmem [resolvable:$true] %s54
      %57 = dma.hbm_to_vmem [thread:$0]  %s3, 64, %s55, [#allocation7]
    $region17: #{apply.1} parent=1 // pred_fallthru
      _
    // Predicated region
    $region18: #{apply.1} parent=1 // pred_check
      _
    $region19: #{apply.1} parent=1 // pred_check_branch
      %59 = sbr.rel (0) target = $region21
    $region20: #{apply.1} parent=1 // pred_region
      _
    $region21: #{apply.1} parent=1 // pred_fallthru
      _
    // Predicated region
    $region22: #{apply.1} parent=1 // pred_check
      _
    $region23: #{apply.1} parent=1 // pred_check_branch
      %61 = sbr.rel (0) target = $region25
    $region24: #{apply.1} parent=1 // pred_region
      %s63 = ssub.s32 2048, 2048
      %64 = vsyncadd [#allocation10], %s63
      %s65 = sshll.u32 [#allocation9], 4
      %s66 = int_to_ptr.vmem [resolvable:$true] %s65
      %71 = dma.hbm_to_vmem [thread:$0]  %s5, 2048, %s66, [#allocation10], 256, 256, 16
    $region25: #{apply.1} parent=1 // pred_fallthru
      _
    // Predicated region
    $region26: #{apply.1} parent=1 // pred_check
      _
    $region27: #{apply.1} parent=1 // pred_check_branch
      %73 = sbr.rel (0) target = $region29
    $region28: #{apply.1} parent=1 // pred_region
      %s75 = ssub.s32 128, 128
      %76 = vsyncadd [#allocation5], %s75
      %s78 = sshll.u32 %s6, 4
      %s79 = int_to_ptr.vmem [resolvable:$true] %s78
      %81 = dma.vmem_to_smem %s79, 128, [#allocation11], [#allocation5]
    $region29: #{apply.1} parent=1 // pred_fallthru
      _
    // Predicated region
    $region30: #{apply.1} parent=1 // pred_check
      _
    $region31: #{apply.1} parent=1 // pred_check_branch
      %83 = sbr.rel (0) target = $region33
    $region32: #{apply.1} parent=1 // pred_region
      %s85 = ssub.s32 16, 16
      %86 = vsyncadd [#allocation13], %s85
      %s88 = sshll.u32 %s7, 4
      %s89 = int_to_ptr.vmem [resolvable:$true] %s88
      %91 = dma.vmem_to_smem %s89, 16, [#allocation12], [#allocation13]
    $region33: #{apply.1} parent=1 // pred_fallthru
      _
    // Predicated region
    $region34: #{apply.1} parent=1 // pred_check
      _
    $region35: #{apply.1} parent=1 // pred_check_branch
      %93 = sbr.rel (0) target = $region37
    $region36: #{apply.1} parent=1 // pred_region
      %s95 = ssub.s32 128, 128
      %96 = vsyncadd [#allocation13], %s95
      %s98 = sshll.u32 %s8, 4
      %s99 = int_to_ptr.vmem [resolvable:$true] %s98
      %101 = dma.vmem_to_smem %s99, 128, [#allocation14], [#allocation13]
    $region37: #{apply.1} parent=1 // pred_fallthru
      _
    // Predicated region
    $region38: #{apply.1} parent=1 // pred_check
      _
    $region39: #{apply.1} parent=1 // pred_check_branch
      %103 = sbr.rel (0) target = $region41
    $region40: #{apply.1} parent=1 // pred_region
      %s105 = ssub.s32 16, 16
      %106 = vsyncadd [#allocation16], %s105
      %s108 = sshll.u32 %s9, 4
      %s109 = int_to_ptr.vmem [resolvable:$true] %s108
      %111 = dma.vmem_to_smem %s109, 16, [#allocation15], [#allocation16]
    $region41: #{apply.1} parent=1 // pred_fallthru
      _
    // Predicated region
    $region42: #{apply.1} parent=1 // pred_check
      _
    $region43: #{apply.1} parent=1 // pred_check_branch
      %113 = sbr.rel (0) target = $region45
    $region44: #{apply.1} parent=1 // pred_region
      %s115 = ssub.s32 16, 16
      %116 = vsyncadd [#allocation16], %s115
      %s118 = sshll.u32 %s10, 4
      %s119 = int_to_ptr.vmem [resolvable:$true] %s118
      %121 = dma.vmem_to_smem %s119, 16, [#allocation17], [#allocation16]
    $region45: #{apply.1} parent=1 // pred_fallthru
      _
    // Predicated region
    $region46: #{apply.1} parent=1 // pred_check
      _
    $region47: #{apply.1} parent=1 // pred_check_branch
      %123 = sbr.rel (0) target = $region49
    $region48: #{apply.1} parent=1 // pred_region
      _
    $region49: #{apply.1} parent=1 // pred_fallthru
      _
    // Predicated region
    $region50: #{apply.1} parent=1 // pred_check
      _
    $region51: #{apply.1} parent=1 // pred_check_branch
      %125 = sbr.rel (0) target = $region53
    $region52: #{apply.1} parent=1 // pred_region
      %126 = dma.done [#allocation4], 256
    $region53: #{apply.1} parent=1 // pred_fallthru
      _
    // Predicated region
    $region54: #{apply.1} parent=1 // pred_check
      _
    $region55: #{apply.1} parent=1 // pred_check_branch
      %128 = sbr.rel (0) target = $region57
    $region56: #{apply.1} parent=1 // pred_region
      %129 = dma.done [#allocation7], 16
    $region57: #{apply.1} parent=1 // pred_fallthru
      _
    // Predicated region
    $region58: #{apply.1} parent=1 // pred_check
      _
    $region59: #{apply.1} parent=1 // pred_check_branch
      %131 = sbr.rel (0) target = $region61
    $region60: #{apply.1} parent=1 // pred_region
      %132 = dma.done [#allocation7], 64
    $region61: #{apply.1} parent=1 // pred_fallthru
      _
    // Predicated region
    $region62: #{apply.1} parent=1 // pred_check
      _
    $region63: #{apply.1} parent=1 // pred_check_branch
      %134 = sbr.rel (0) target = $region65
    $region64: #{apply.1} parent=1 // pred_region
      %135 = dma.done [#allocation10], 2048
    $region65: #{apply.1} parent=1 // pred_fallthru
      _
    // Predicated region
    $region66: #{apply.1} parent=1 // pred_check
      _
    $region67: #{apply.1} parent=1 // pred_check_branch
      %137 = sbr.rel (0) target = $region69
    $region68: #{apply.1} parent=1 // pred_region
      %138 = dma.done [#allocation5], 128
    $region69: #{apply.1} parent=1 // pred_fallthru
      _
    // Predicated region
    $region70: #{apply.1} parent=1 // pred_check
      _
    $region71: #{apply.1} parent=1 // pred_check_branch
      %140 = sbr.rel (0) target = $region73
    $region72: #{apply.1} parent=1 // pred_region
      %141 = dma.done [#allocation13], 16
    $region73: #{apply.1} parent=1 // pred_fallthru
      _
    // Predicated region
    $region74: #{apply.1} parent=1 // pred_check
      _
    $region75: #{apply.1} parent=1 // pred_check_branch
      %143 = sbr.rel (0) target = $region77
    $region76: #{apply.1} parent=1 // pred_region
      %144 = dma.done [#allocation13], 128
    $region77: #{apply.1} parent=1 // pred_fallthru
      _
    // Predicated region
    $region78: #{apply.1} parent=1 // pred_check
      _
    $region79: #{apply.1} parent=1 // pred_check_branch
      %146 = sbr.rel (0) target = $region81
    $region80: #{apply.1} parent=1 // pred_region
      %147 = dma.done [#allocation16], 16
    $region81: #{apply.1} parent=1 // pred_fallthru
      _
    // Predicated region
    $region82: #{apply.1} parent=1 // pred_check
      _
    $region83: #{apply.1} parent=1 // pred_check_branch
      %149 = sbr.rel (0) target = $region85
    $region84: #{apply.1} parent=1 // pred_region
      %150 = dma.done [#allocation16], 16
    $region85: #{apply.1} parent=1 // pred_fallthru
      _
    %151 = sfence
    %v152 = vld [vmem:[%s0] sm:$0xff]
    %v153 = vld [vmem:[#allocation3] sm:$0xff]
    %v154 = vld [vmem:[#allocation3 + $0x8] sm:$0xff]
    %v155 = vld [vmem:[#allocation6] sm:$0x1]
    %v157 = vlaneseq
    %v158 = vshrl.u32 %v157, 7
    %v159 = vsub.s32 0, %v158
    %v160 = vrot.slane %v155, %v159
    %vm162 = vcmask 130048
    %v164 = vsel %vm162, %v152, 0
    %166 = vmatprep.subr.mxu0 0.0
    %167 = vmatpush1.msra.mxu0 %v153
    %168 = vmatprep.subr.mxu0 0.0
    %169 = vmatpush1.msra.mxu0 %v154
    %170 = vmatprep.subr.mxu0 0.0
    %171 = vmatpush1.msra.mxu0 0.0
    %172 = vmatprep.subr.mxu0 0.0
    %173 = vmatpush1.msra.mxu0 0.0
    %174 = vmatprep.subr.mxu0 0.0
    %175 = vmatpush1.msra.mxu0 0.0
    %176 = vmatprep.subr.mxu0 0.0
    %177 = vmatpush1.msra.mxu0 0.0
    %178 = vmatprep.subr.mxu0 0.0
    %179 = vmatpush1.msra.mxu0 0.0
    %180 = vmatprep.subr.mxu0 0.0
    %181 = vmatpush1.msra.mxu0 0.0
    %182 = vmatprep.subr.mxu0 0.0
    %183 = vmatpush1.msra.mxu0 0.0
    %184 = vmatprep.subr.mxu0 0.0
    %185 = vmatpush1.msra.mxu0 0.0
    %186 = vmatprep.subr.mxu0 0.0
    %187 = vmatpush1.msra.mxu0 0.0
    %188 = vmatprep.subr.mxu0 0.0
    %189 = vmatpush1.msra.mxu0 0.0
    %190 = vmatprep.subr.mxu0 0.0
    %191 = vmatpush1.msra.mxu0 0.0
    %192 = vmatprep.subr.mxu0 0.0
    %193 = vmatpush1.msra.mxu0 0.0
    %194 = vmatprep.subr.mxu0 0.0
    %195 = vmatpush1.msra.mxu0 0.0
    %196 = vmatprep.subr.mxu0 0.0
    %197 = vmatpush1.msra.mxu0 0.0
    %198 = vmatprep.subr.mxu0 0.0
    %199 = vmatpush1.msra.mxu0 0.0
    %200 = vmatprep.subr.mxu0 0.0
    %201 = vmatpush1.msra.mxu0 0.0
    %202 = vmatprep.subr.mxu0 0.0
    %203 = vmatpush1.msra.mxu0 0.0
    %204 = vmatprep.subr.mxu0 0.0
    %205 = vmatpush1.msra.mxu0 0.0
    %206 = vmatprep.subr.mxu0 0.0
    %207 = vmatpush1.msra.mxu0 0.0
    %208 = vmatprep.subr.mxu0 0.0
    %209 = vmatpush1.msra.mxu0 0.0
    %210 = vmatprep.subr.mxu0 0.0
    %211 = vmatpush1.msra.mxu0 0.0
    %212 = vmatprep.subr.mxu0 0.0
    %213 = vmatpush1.msra.mxu0 0.0
    %214 = vmatprep.subr.mxu0 0.0
    %215 = vmatpush1.msra.mxu0 0.0
    %216 = vmatprep.subr.mxu0 0.0
    %217 = vmatpush1.msra.mxu0 0.0
    %218 = vmatprep.subr.mxu0 0.0
    %219 = vmatpush1.msra.mxu0 0.0
    %220 = vmatprep.subr.mxu0 0.0
    %221 = vmatpush1.msra.mxu0 0.0
    %222 = vmatprep.subr.mxu0 0.0
    %223 = vmatpush1.msra.mxu0 0.0
    %224 = vmatprep.subr.mxu0 0.0
    %225 = vmatpush1.msra.mxu0 0.0
    %226 = vmatprep.subr.mxu0 0.0
    %227 = vmatpush1.msra.mxu0 0.0
    %228 = vmatprep.subr.mxu0 0.0
    %229 = vmatpush1.msra.mxu0 0.0
    %230 = vmatprep.mubr.f32.mxu0 0.0
    %231 = vmatmul.mubr.f32.gmra.mrb[0].mxu0 %v164
    %v232 = vpop.f32.mrb[0].mxu0
    %v233 = vadd.f32 %v160, %v232
    %v234 = vpop.f32.mrb[0].mxu0
    %235 = vdwg.mxu0
    %v236 = vmax.f32 %v233, 0.0
    %s237 = sld [smem:[#allocation11]]
    %v238 = vstv %s237
    %v239 = vmul.f32 %v236, %v238
    %s240 = sld [smem:[#allocation11 + $0x1]]
    %v241 = vstv %s240
    %v242 = vmul.f32 %v236, %v241
    %244 = vrot.lane.b32.xlu0 %v242, 124
    %v245 = vpop.permute.xlu0 %244
    %v247 = vadd.f32 %v239, %v245
    %s248 = sld [smem:[#allocation11 + $0x2]]
    %v249 = vstv %s248
    %v250 = vmul.f32 %v236, %v249
    %252 = vrot.lane.b32.xlu0 %v250, 120
    %v253 = vpop.permute.xlu0 %252
    %v255 = vadd.f32 %v247, %v253
    %s256 = sld [smem:[#allocation11 + $0x3]]
    %v257 = vstv %s256
    %v258 = vmul.f32 %v236, %v257
    %260 = vrot.lane.b32.xlu0 %v258, 116
    %v261 = vpop.permute.xlu0 %260
    %v263 = vadd.f32 %v255, %v261
    %s264 = sld [smem:[#allocation11 + $0x4]]
    %v265 = vstv %s264
    %v266 = vmul.f32 %v236, %v265
    %268 = vrot.lane.b32.xlu0 %v266, 112
    %v269 = vpop.permute.xlu0 %268
    %v271 = vadd.f32 %v263, %v269
    %s272 = sld [smem:[#allocation11 + $0x5]]
    %v273 = vstv %s272
    %v274 = vmul.f32 %v236, %v273
    %276 = vrot.lane.b32.xlu0 %v274, 108
    %v277 = vpop.permute.xlu0 %276
    %v279 = vadd.f32 %v271, %v277
    %s280 = sld [smem:[#allocation11 + $0x6]]
    %v281 = vstv %s280
    %v282 = vmul.f32 %v236, %v281
    %284 = vrot.lane.b32.xlu0 %v282, 104
    %v285 = vpop.permute.xlu0 %284
    %v287 = vadd.f32 %v279, %v285
    %s288 = sld [smem:[#allocation11 + $0x7]]
    %v289 = vstv %s288
    %v290 = vmul.f32 %v236, %v289
    %292 = vrot.lane.b32.xlu0 %v290, 100
    %v293 = vpop.permute.xlu0 %292
    %v295 = vadd.f32 %v287, %v293
    %s296 = sld [smem:[#allocation11 + $0x8]]
    %v297 = vstv %s296
    %v298 = vmul.f32 %v236, %v297
    %300 = vrot.lane.b32.xlu0 %v298, 96
    %v301 = vpop.permute.xlu0 %300
    %v303 = vadd.f32 %v295, %v301
    %s304 = sld [smem:[#allocation11 + $0x9]]
    %v305 = vstv %s304
    %v306 = vmul.f32 %v236, %v305
    %308 = vrot.lane.b32.xlu0 %v306, 92
    %v309 = vpop.permute.xlu0 %308
    %v311 = vadd.f32 %v303, %v309
    %s312 = sld [smem:[#allocation11 + $0xa]]
    %v313 = vstv %s312
    %v314 = vmul.f32 %v236, %v313
    %316 = vrot.lane.b32.xlu0 %v314, 88
    %v317 = vpop.permute.xlu0 %316
    %v319 = vadd.f32 %v311, %v317
    %s320 = sld [smem:[#allocation11 + $0xb]]
    %v321 = vstv %s320
    %v322 = vmul.f32 %v236, %v321
    %324 = vrot.lane.b32.xlu0 %v322, 84
    %v325 = vpop.permute.xlu0 %324
    %v327 = vadd.f32 %v319, %v325
    %s328 = sld [smem:[#allocation11 + $0xc]]
    %v329 = vstv %s328
    %v330 = vmul.f32 %v236, %v329
    %332 = vrot.lane.b32.xlu0 %v330, 80
    %v333 = vpop.permute.xlu0 %332
    %v335 = vadd.f32 %v327, %v333
    %s336 = sld [smem:[#allocation11 + $0xd]]
    %v337 = vstv %s336
    %v338 = vmul.f32 %v236, %v337
    %340 = vrot.lane.b32.xlu0 %v338, 76
    %v341 = vpop.permute.xlu0 %340
    %v343 = vadd.f32 %v335, %v341
    %s344 = sld [smem:[#allocation11 + $0xe]]
    %v345 = vstv %s344
    %v346 = vmul.f32 %v236, %v345
    %348 = vrot.lane.b32.xlu0 %v346, 72
    %v349 = vpop.permute.xlu0 %348
    %v351 = vadd.f32 %v343, %v349
    %s352 = sld [smem:[#allocation11 + $0xf]]
    %v353 = vstv %s352
    %v354 = vmul.f32 %v236, %v353
    %356 = vrot.lane.b32.xlu0 %v354, 68
    %v357 = vpop.permute.xlu0 %356
    %v359 = vadd.f32 %v351, %v357
    %s360 = sld [smem:[#allocation12]]
    %v361 = vstv %s360
    %v362 = vadd.f32 %v359, %v361
    %s363 = sld [smem:[#allocation11 + $0x80]]
    %v364 = vstv %s363
    %v365 = vmul.f32 %v236, %v364
    %s366 = sld [smem:[#allocation11 + $0x81]]
    %v367 = vstv %s366
    %v368 = vmul.f32 %v236, %v367
    %370 = vrot.lane.b32.xlu0 %v368, 124
    %v371 = vpop.permute.xlu0 %370
    %v373 = vadd.f32 %v365, %v371
    %s374 = sld [smem:[#allocation11 + $0x82]]
    %v375 = vstv %s374
    %v376 = vmul.f32 %v236, %v375
    %378 = vrot.lane.b32.xlu0 %v376, 120
    %v379 = vpop.permute.xlu0 %378
    %v381 = vadd.f32 %v373, %v379
    %s382 = sld [smem:[#allocation11 + $0x83]]
    %v383 = vstv %s382
    %v384 = vmul.f32 %v236, %v383
    %386 = vrot.lane.b32.xlu0 %v384, 116
    %v387 = vpop.permute.xlu0 %386
    %v389 = vadd.f32 %v381, %v387
    %s390 = sld [smem:[#allocation11 + $0x84]]
    %v391 = vstv %s390
    %v392 = vmul.f32 %v236, %v391
    %394 = vrot.lane.b32.xlu0 %v392, 112
    %v395 = vpop.permute.xlu0 %394
    %v397 = vadd.f32 %v389, %v395
    %s398 = sld [smem:[#allocation11 + $0x85]]
    %v399 = vstv %s398
    %v400 = vmul.f32 %v236, %v399
    %402 = vrot.lane.b32.xlu0 %v400, 108
    %v403 = vpop.permute.xlu0 %402
    %v405 = vadd.f32 %v397, %v403
    %s406 = sld [smem:[#allocation11 + $0x86]]
    %v407 = vstv %s406
    %v408 = vmul.f32 %v236, %v407
    %410 = vrot.lane.b32.xlu0 %v408, 104
    %v411 = vpop.permute.xlu0 %410
    %v413 = vadd.f32 %v405, %v411
    %s414 = sld [smem:[#allocation11 + $0x87]]
    %v415 = vstv %s414
    %v416 = vmul.f32 %v236, %v415
    %418 = vrot.lane.b32.xlu0 %v416, 100
    %v419 = vpop.permute.xlu0 %418
    %v421 = vadd.f32 %v413, %v419
    %s422 = sld [smem:[#allocation11 + $0x88]]
    %v423 = vstv %s422
    %v424 = vmul.f32 %v236, %v423
    %426 = vrot.lane.b32.xlu0 %v424, 96
    %v427 = vpop.permute.xlu0 %426
    %v429 = vadd.f32 %v421, %v427
    %s430 = sld [smem:[#allocation11 + $0x89]]
    %v431 = vstv %s430
    %v432 = vmul.f32 %v236, %v431
    %434 = vrot.lane.b32.xlu0 %v432, 92
    %v435 = vpop.permute.xlu0 %434
    %v437 = vadd.f32 %v429, %v435
    %s438 = sld [smem:[#allocation11 + $0x8a]]
    %v439 = vstv %s438
    %v440 = vmul.f32 %v236, %v439
    %442 = vrot.lane.b32.xlu0 %v440, 88
    %v443 = vpop.permute.xlu0 %442
    %v445 = vadd.f32 %v437, %v443
    %s446 = sld [smem:[#allocation11 + $0x8b]]
    %v447 = vstv %s446
    %v448 = vmul.f32 %v236, %v447
    %450 = vrot.lane.b32.xlu0 %v448, 84
    %v451 = vpop.permute.xlu0 %450
    %v453 = vadd.f32 %v445, %v451
    %s454 = sld [smem:[#allocation11 + $0x8c]]
    %v455 = vstv %s454
    %v456 = vmul.f32 %v236, %v455
    %458 = vrot.lane.b32.xlu0 %v456, 80
    %v459 = vpop.permute.xlu0 %458
    %v461 = vadd.f32 %v453, %v459
    %s462 = sld [smem:[#allocation11 + $0x8d]]
    %v463 = vstv %s462
    %v464 = vmul.f32 %v236, %v463
    %466 = vrot.lane.b32.xlu0 %v464, 76
    %v467 = vpop.permute.xlu0 %466
    %v469 = vadd.f32 %v461, %v467
    %s470 = sld [smem:[#allocation11 + $0x8e]]
    %v471 = vstv %s470
    %v472 = vmul.f32 %v236, %v471
    %474 = vrot.lane.b32.xlu0 %v472, 72
    %v475 = vpop.permute.xlu0 %474
    %v477 = vadd.f32 %v469, %v475
    %s478 = sld [smem:[#allocation11 + $0x8f]]
    %v479 = vstv %s478
    %v480 = vmul.f32 %v236, %v479
    %482 = vrot.lane.b32.xlu0 %v480, 68
    %v483 = vpop.permute.xlu0 %482
    %v485 = vadd.f32 %v477, %v483
    %s486 = sld [smem:[#allocation12 + $0x1]]
    %v487 = vstv %s486
    %v488 = vadd.f32 %v485, %v487
    %s489 = sld [smem:[#allocation11 + $0x100]]
    %v490 = vstv %s489
    %v491 = vmul.f32 %v236, %v490
    %s492 = sld [smem:[#allocation11 + $0x101]]
    %v493 = vstv %s492
    %v494 = vmul.f32 %v236, %v493
    %496 = vrot.lane.b32.xlu0 %v494, 124
    %v497 = vpop.permute.xlu0 %496
    %v499 = vadd.f32 %v491, %v497
    %s500 = sld [smem:[#allocation11 + $0x102]]
    %v501 = vstv %s500
    %v502 = vmul.f32 %v236, %v501
    %504 = vrot.lane.b32.xlu0 %v502, 120
    %v505 = vpop.permute.xlu0 %504
    %v507 = vadd.f32 %v499, %v505
    %s508 = sld [smem:[#allocation11 + $0x103]]
    %v509 = vstv %s508
    %v510 = vmul.f32 %v236, %v509
    %512 = vrot.lane.b32.xlu0 %v510, 116
    %v513 = vpop.permute.xlu0 %512
    %v515 = vadd.f32 %v507, %v513
    %s516 = sld [smem:[#allocation11 + $0x104]]
    %v517 = vstv %s516
    %v518 = vmul.f32 %v236, %v517
    %520 = vrot.lane.b32.xlu0 %v518, 112
    %v521 = vpop.permute.xlu0 %520
    %v523 = vadd.f32 %v515, %v521
    %s524 = sld [smem:[#allocation11 + $0x105]]
    %v525 = vstv %s524
    %v526 = vmul.f32 %v236, %v525
    %528 = vrot.lane.b32.xlu0 %v526, 108
    %v529 = vpop.permute.xlu0 %528
    %v531 = vadd.f32 %v523, %v529
    %s532 = sld [smem:[#allocation11 + $0x106]]
    %v533 = vstv %s532
    %v534 = vmul.f32 %v236, %v533
    %536 = vrot.lane.b32.xlu0 %v534, 104
    %v537 = vpop.permute.xlu0 %536
    %v539 = vadd.f32 %v531, %v537
    %s540 = sld [smem:[#allocation11 + $0x107]]
    %v541 = vstv %s540
    %v542 = vmul.f32 %v236, %v541
    %544 = vrot.lane.b32.xlu0 %v542, 100
    %v545 = vpop.permute.xlu0 %544
    %v547 = vadd.f32 %v539, %v545
    %s548 = sld [smem:[#allocation11 + $0x108]]
    %v549 = vstv %s548
    %v550 = vmul.f32 %v236, %v549
    %552 = vrot.lane.b32.xlu0 %v550, 96
    %v553 = vpop.permute.xlu0 %552
    %v555 = vadd.f32 %v547, %v553
    %s556 = sld [smem:[#allocation11 + $0x109]]
    %v557 = vstv %s556
    %v558 = vmul.f32 %v236, %v557
    %560 = vrot.lane.b32.xlu0 %v558, 92
    %v561 = vpop.permute.xlu0 %560
    %v563 = vadd.f32 %v555, %v561
    %s564 = sld [smem:[#allocation11 + $0x10a]]
    %v565 = vstv %s564
    %v566 = vmul.f32 %v236, %v565
    %568 = vrot.lane.b32.xlu0 %v566, 88
    %v569 = vpop.permute.xlu0 %568
    %v571 = vadd.f32 %v563, %v569
    %s572 = sld [smem:[#allocation11 + $0x10b]]
    %v573 = vstv %s572
    %v574 = vmul.f32 %v236, %v573
    %576 = vrot.lane.b32.xlu0 %v574, 84
    %v577 = vpop.permute.xlu0 %576
    %v579 = vadd.f32 %v571, %v577
    %s580 = sld [smem:[#allocation11 + $0x10c]]
    %v581 = vstv %s580
    %v582 = vmul.f32 %v236, %v581
    %584 = vrot.lane.b32.xlu0 %v582, 80
    %v585 = vpop.permute.xlu0 %584
    %v587 = vadd.f32 %v579, %v585
    %s588 = sld [smem:[#allocation11 + $0x10d]]
    %v589 = vstv %s588
    %v590 = vmul.f32 %v236, %v589
    %592 = vrot.lane.b32.xlu0 %v590, 76
    %v593 = vpop.permute.xlu0 %592
    %v595 = vadd.f32 %v587, %v593
    %s596 = sld [smem:[#allocation11 + $0x10e]]
    %v597 = vstv %s596
    %v598 = vmul.f32 %v236, %v597
    %600 = vrot.lane.b32.xlu0 %v598, 72
    %v601 = vpop.permute.xlu0 %600
    %v603 = vadd.f32 %v595, %v601
    %s604 = sld [smem:[#allocation11 + $0x10f]]
    %v605 = vstv %s604
    %v606 = vmul.f32 %v236, %v605
    %608 = vrot.lane.b32.xlu0 %v606, 68
    %v609 = vpop.permute.xlu0 %608
    %v611 = vadd.f32 %v603, %v609
    %s612 = sld [smem:[#allocation12 + $0x2]]
    %v613 = vstv %s612
    %v614 = vadd.f32 %v611, %v613
    %s615 = sld [smem:[#allocation11 + $0x180]]
    %v616 = vstv %s615
    %v617 = vmul.f32 %v236, %v616
    %s618 = sld [smem:[#allocation11 + $0x181]]
    %v619 = vstv %s618
    %v620 = vmul.f32 %v236, %v619
    %622 = vrot.lane.b32.xlu0 %v620, 124
    %v623 = vpop.permute.xlu0 %622
    %v625 = vadd.f32 %v617, %v623
    %s626 = sld [smem:[#allocation11 + $0x182]]
    %v627 = vstv %s626
    %v628 = vmul.f32 %v236, %v627
    %630 = vrot.lane.b32.xlu0 %v628, 120
    %v631 = vpop.permute.xlu0 %630
    %v633 = vadd.f32 %v625, %v631
    %s634 = sld [smem:[#allocation11 + $0x183]]
    %v635 = vstv %s634
    %v636 = vmul.f32 %v236, %v635
    %638 = vrot.lane.b32.xlu0 %v636, 116
    %v639 = vpop.permute.xlu0 %638
    %v641 = vadd.f32 %v633, %v639
    %s642 = sld [smem:[#allocation11 + $0x184]]
    %v643 = vstv %s642
    %v644 = vmul.f32 %v236, %v643
    %646 = vrot.lane.b32.xlu0 %v644, 112
    %v647 = vpop.permute.xlu0 %646
    %v649 = vadd.f32 %v641, %v647
    %s650 = sld [smem:[#allocation11 + $0x185]]
    %v651 = vstv %s650
    %v652 = vmul.f32 %v236, %v651
    %654 = vrot.lane.b32.xlu0 %v652, 108
    %v655 = vpop.permute.xlu0 %654
    %v657 = vadd.f32 %v649, %v655
    %s658 = sld [smem:[#allocation11 + $0x186]]
    %v659 = vstv %s658
    %v660 = vmul.f32 %v236, %v659
    %662 = vrot.lane.b32.xlu0 %v660, 104
    %v663 = vpop.permute.xlu0 %662
    %v665 = vadd.f32 %v657, %v663
    %s666 = sld [smem:[#allocation11 + $0x187]]
    %v667 = vstv %s666
    %v668 = vmul.f32 %v236, %v667
    %670 = vrot.lane.b32.xlu0 %v668, 100
    %v671 = vpop.permute.xlu0 %670
    %v673 = vadd.f32 %v665, %v671
    %s674 = sld [smem:[#allocation11 + $0x188]]
    %v675 = vstv %s674
    %v676 = vmul.f32 %v236, %v675
    %678 = vrot.lane.b32.xlu0 %v676, 96
    %v679 = vpop.permute.xlu0 %678
    %v681 = vadd.f32 %v673, %v679
    %s682 = sld [smem:[#allocation11 + $0x189]]
    %v683 = vstv %s682
    %v684 = vmul.f32 %v236, %v683
    %686 = vrot.lane.b32.xlu0 %v684, 92
    %v687 = vpop.permute.xlu0 %686
    %v689 = vadd.f32 %v681, %v687
    %s690 = sld [smem:[#allocation11 + $0x18a]]
    %v691 = vstv %s690
    %v692 = vmul.f32 %v236, %v691
    %694 = vrot.lane.b32.xlu0 %v692, 88
    %v695 = vpop.permute.xlu0 %694
    %v697 = vadd.f32 %v689, %v695
    %s698 = sld [smem:[#allocation11 + $0x18b]]
    %v699 = vstv %s698
    %v700 = vmul.f32 %v236, %v699
    %702 = vrot.lane.b32.xlu0 %v700, 84
    %v703 = vpop.permute.xlu0 %702
    %v705 = vadd.f32 %v697, %v703
    %s706 = sld [smem:[#allocation11 + $0x18c]]
    %v707 = vstv %s706
    %v708 = vmul.f32 %v236, %v707
    %710 = vrot.lane.b32.xlu0 %v708, 80
    %v711 = vpop.permute.xlu0 %710
    %v713 = vadd.f32 %v705, %v711
    %s714 = sld [smem:[#allocation11 + $0x18d]]
    %v715 = vstv %s714
    %v716 = vmul.f32 %v236, %v715
    %718 = vrot.lane.b32.xlu0 %v716, 76
    %v719 = vpop.permute.xlu0 %718
    %v721 = vadd.f32 %v713, %v719
    %s722 = sld [smem:[#allocation11 + $0x18e]]
    %v723 = vstv %s722
    %v724 = vmul.f32 %v236, %v723
    %726 = vrot.lane.b32.xlu0 %v724, 72
    %v727 = vpop.permute.xlu0 %726
    %v729 = vadd.f32 %v721, %v727
    %s730 = sld [smem:[#allocation11 + $0x18f]]
    %v731 = vstv %s730
    %v732 = vmul.f32 %v236, %v731
    %734 = vrot.lane.b32.xlu0 %v732, 68
    %v735 = vpop.permute.xlu0 %734
    %v737 = vadd.f32 %v729, %v735
    %s738 = sld [smem:[#allocation12 + $0x3]]
    %v739 = vstv %s738
    %v740 = vadd.f32 %v737, %v739
    %s741 = sld [smem:[#allocation11 + $0x200]]
    %v742 = vstv %s741
    %v743 = vmul.f32 %v236, %v742
    %s744 = sld [smem:[#allocation11 + $0x201]]
    %v745 = vstv %s744
    %v746 = vmul.f32 %v236, %v745
    %748 = vrot.lane.b32.xlu0 %v746, 124
    %v749 = vpop.permute.xlu0 %748
    %v751 = vadd.f32 %v743, %v749
    %s752 = sld [smem:[#allocation11 + $0x202]]
    %v753 = vstv %s752
    %v754 = vmul.f32 %v236, %v753
    %756 = vrot.lane.b32.xlu0 %v754, 120
    %v757 = vpop.permute.xlu0 %756
    %v759 = vadd.f32 %v751, %v757
    %s760 = sld [smem:[#allocation11 + $0x203]]
    %v761 = vstv %s760
    %v762 = vmul.f32 %v236, %v761
    %764 = vrot.lane.b32.xlu0 %v762, 116
    %v765 = vpop.permute.xlu0 %764
    %v767 = vadd.f32 %v759, %v765
    %s768 = sld [smem:[#allocation11 + $0x204]]
    %v769 = vstv %s768
    %v770 = vmul.f32 %v236, %v769
    %772 = vrot.lane.b32.xlu0 %v770, 112
    %v773 = vpop.permute.xlu0 %772
    %v775 = vadd.f32 %v767, %v773
    %s776 = sld [smem:[#allocation11 + $0x205]]
    %v777 = vstv %s776
    %v778 = vmul.f32 %v236, %v777
    %780 = vrot.lane.b32.xlu0 %v778, 108
    %v781 = vpop.permute.xlu0 %780
    %v783 = vadd.f32 %v775, %v781
    %s784 = sld [smem:[#allocation11 + $0x206]]
    %v785 = vstv %s784
    %v786 = vmul.f32 %v236, %v785
    %788 = vrot.lane.b32.xlu0 %v786, 104
    %v789 = vpop.permute.xlu0 %788
    %v791 = vadd.f32 %v783, %v789
    %s792 = sld [smem:[#allocation11 + $0x207]]
    %v793 = vstv %s792
    %v794 = vmul.f32 %v236, %v793
    %796 = vrot.lane.b32.xlu0 %v794, 100
    %v797 = vpop.permute.xlu0 %796
    %v799 = vadd.f32 %v791, %v797
    %s800 = sld [smem:[#allocation11 + $0x208]]
    %v801 = vstv %s800
    %v802 = vmul.f32 %v236, %v801
    %804 = vrot.lane.b32.xlu0 %v802, 96
    %v805 = vpop.permute.xlu0 %804
    %v807 = vadd.f32 %v799, %v805
    %s808 = sld [smem:[#allocation11 + $0x209]]
    %v809 = vstv %s808
    %v810 = vmul.f32 %v236, %v809
    %812 = vrot.lane.b32.xlu0 %v810, 92
    %v813 = vpop.permute.xlu0 %812
    %v815 = vadd.f32 %v807, %v813
    %s816 = sld [smem:[#allocation11 + $0x20a]]
    %v817 = vstv %s816
    %v818 = vmul.f32 %v236, %v817
    %820 = vrot.lane.b32.xlu0 %v818, 88
    %v821 = vpop.permute.xlu0 %820
    %v823 = vadd.f32 %v815, %v821
    %s824 = sld [smem:[#allocation11 + $0x20b]]
    %v825 = vstv %s824
    %v826 = vmul.f32 %v236, %v825
    %828 = vrot.lane.b32.xlu0 %v826, 84
    %v829 = vpop.permute.xlu0 %828
    %v831 = vadd.f32 %v823, %v829
    %s832 = sld [smem:[#allocation11 + $0x20c]]
    %v833 = vstv %s832
    %v834 = vmul.f32 %v236, %v833
    %836 = vrot.lane.b32.xlu0 %v834, 80
    %v837 = vpop.permute.xlu0 %836
    %v839 = vadd.f32 %v831, %v837
    %s840 = sld [smem:[#allocation11 + $0x20d]]
    %v841 = vstv %s840
    %v842 = vmul.f32 %v236, %v841
    %844 = vrot.lane.b32.xlu0 %v842, 76
    %v845 = vpop.permute.xlu0 %844
    %v847 = vadd.f32 %v839, %v845
    %s848 = sld [smem:[#allocation11 + $0x20e]]
    %v849 = vstv %s848
    %v850 = vmul.f32 %v236, %v849
    %852 = vrot.lane.b32.xlu0 %v850, 72
    %v853 = vpop.permute.xlu0 %852
    %v855 = vadd.f32 %v847, %v853
    %s856 = sld [smem:[#allocation11 + $0x20f]]
    %v857 = vstv %s856
    %v858 = vmul.f32 %v236, %v857
    %860 = vrot.lane.b32.xlu0 %v858, 68
    %v861 = vpop.permute.xlu0 %860
    %v863 = vadd.f32 %v855, %v861
    %s864 = sld [smem:[#allocation12 + $0x4]]
    %v865 = vstv %s864
    %v866 = vadd.f32 %v863, %v865
    %s867 = sld [smem:[#allocation11 + $0x280]]
    %v868 = vstv %s867
    %v869 = vmul.f32 %v236, %v868
    %s870 = sld [smem:[#allocation11 + $0x281]]
    %v871 = vstv %s870
    %v872 = vmul.f32 %v236, %v871
    %874 = vrot.lane.b32.xlu0 %v872, 124
    %v875 = vpop.permute.xlu0 %874
    %v877 = vadd.f32 %v869, %v875
    %s878 = sld [smem:[#allocation11 + $0x282]]
    %v879 = vstv %s878
    %v880 = vmul.f32 %v236, %v879
    %882 = vrot.lane.b32.xlu0 %v880, 120
    %v883 = vpop.permute.xlu0 %882
    %v885 = vadd.f32 %v877, %v883
    %s886 = sld [smem:[#allocation11 + $0x283]]
    %v887 = vstv %s886
    %v888 = vmul.f32 %v236, %v887
    %890 = vrot.lane.b32.xlu0 %v888, 116
    %v891 = vpop.permute.xlu0 %890
    %v893 = vadd.f32 %v885, %v891
    %s894 = sld [smem:[#allocation11 + $0x284]]
    %v895 = vstv %s894
    %v896 = vmul.f32 %v236, %v895
    %898 = vrot.lane.b32.xlu0 %v896, 112
    %v899 = vpop.permute.xlu0 %898
    %v901 = vadd.f32 %v893, %v899
    %s902 = sld [smem:[#allocation11 + $0x285]]
    %v903 = vstv %s902
    %v904 = vmul.f32 %v236, %v903
    %906 = vrot.lane.b32.xlu0 %v904, 108
    %v907 = vpop.permute.xlu0 %906
    %v909 = vadd.f32 %v901, %v907
    %s910 = sld [smem:[#allocation11 + $0x286]]
    %v911 = vstv %s910
    %v912 = vmul.f32 %v236, %v911
    %914 = vrot.lane.b32.xlu0 %v912, 104
    %v915 = vpop.permute.xlu0 %914
    %v917 = vadd.f32 %v909, %v915
    %s918 = sld [smem:[#allocation11 + $0x287]]
    %v919 = vstv %s918
    %v920 = vmul.f32 %v236, %v919
    %922 = vrot.lane.b32.xlu0 %v920, 100
    %v923 = vpop.permute.xlu0 %922
    %v925 = vadd.f32 %v917, %v923
    %s926 = sld [smem:[#allocation11 + $0x288]]
    %v927 = vstv %s926
    %v928 = vmul.f32 %v236, %v927
    %930 = vrot.lane.b32.xlu0 %v928, 96
    %v931 = vpop.permute.xlu0 %930
    %v933 = vadd.f32 %v925, %v931
    %s934 = sld [smem:[#allocation11 + $0x289]]
    %v935 = vstv %s934
    %v936 = vmul.f32 %v236, %v935
    %938 = vrot.lane.b32.xlu0 %v936, 92
    %v939 = vpop.permute.xlu0 %938
    %v941 = vadd.f32 %v933, %v939
    %s942 = sld [smem:[#allocation11 + $0x28a]]
    %v943 = vstv %s942
    %v944 = vmul.f32 %v236, %v943
    %946 = vrot.lane.b32.xlu0 %v944, 88
    %v947 = vpop.permute.xlu0 %946
    %v949 = vadd.f32 %v941, %v947
    %s950 = sld [smem:[#allocation11 + $0x28b]]
    %v951 = vstv %s950
    %v952 = vmul.f32 %v236, %v951
    %954 = vrot.lane.b32.xlu0 %v952, 84
    %v955 = vpop.permute.xlu0 %954
    %v957 = vadd.f32 %v949, %v955
    %s958 = sld [smem:[#allocation11 + $0x28c]]
    %v959 = vstv %s958
    %v960 = vmul.f32 %v236, %v959
    %962 = vrot.lane.b32.xlu0 %v960, 80
    %v963 = vpop.permute.xlu0 %962
    %v965 = vadd.f32 %v957, %v963
    %s966 = sld [smem:[#allocation11 + $0x28d]]
    %v967 = vstv %s966
    %v968 = vmul.f32 %v236, %v967
    %970 = vrot.lane.b32.xlu0 %v968, 76
    %v971 = vpop.permute.xlu0 %970
    %v973 = vadd.f32 %v965, %v971
    %s974 = sld [smem:[#allocation11 + $0x28e]]
    %v975 = vstv %s974
    %v976 = vmul.f32 %v236, %v975
    %978 = vrot.lane.b32.xlu0 %v976, 72
    %v979 = vpop.permute.xlu0 %978
    %v981 = vadd.f32 %v973, %v979
    %s982 = sld [smem:[#allocation11 + $0x28f]]
    %v983 = vstv %s982
    %v984 = vmul.f32 %v236, %v983
    %986 = vrot.lane.b32.xlu0 %v984, 68
    %v987 = vpop.permute.xlu0 %986
    %v989 = vadd.f32 %v981, %v987
    %s990 = sld [smem:[#allocation12 + $0x5]]
    %v991 = vstv %s990
    %v992 = vadd.f32 %v989, %v991
    %v993 = vld [vmem:[#allocation8] sm:$0xf]
    %vm994 = vcmask 31744
    %v996 = vsel %vm994, %v362, 0
    %v999 = vsel %vm994, %v488, 0
    %v1002 = vsel %vm994, %v614, 0
    %v1005 = vsel %vm994, %v740, 0
    %v1008 = vsel %vm994, %v866, 0
    %v1011 = vsel %vm994, %v992, 0
    %vm1013 = vcmask 1043456
    %v1015 = vsel %vm1013, %v993, 0
    %1017 = vmatprep.subr.mxu0 0.0
    %1018 = vmatpush1.msra.mxu0 %v1015
    %1019 = vmatprep.subr.mxu0 0.0
    %1020 = vmatpush1.msra.mxu0 0.0
    %1021 = vmatprep.subr.mxu0 0.0
    %1022 = vmatpush1.msra.mxu0 0.0
    %1023 = vmatprep.subr.mxu0 0.0
    %1024 = vmatpush1.msra.mxu0 0.0
    %1025 = vmatprep.subr.mxu0 0.0
    %1026 = vmatpush1.msra.mxu0 0.0
    %1027 = vmatprep.subr.mxu0 0.0
    %1028 = vmatpush1.msra.mxu0 0.0
    %1029 = vmatprep.subr.mxu0 0.0
    %1030 = vmatpush1.msra.mxu0 0.0
    %1031 = vmatprep.subr.mxu0 0.0
    %1032 = vmatpush1.msra.mxu0 0.0
    %1033 = vmatprep.subr.mxu0 0.0
    %1034 = vmatpush1.msra.mxu0 0.0
    %1035 = vmatprep.subr.mxu0 0.0
    %1036 = vmatpush1.msra.mxu0 0.0
    %1037 = vmatprep.subr.mxu0 0.0
    %1038 = vmatpush1.msra.mxu0 0.0
    %1039 = vmatprep.subr.mxu0 0.0
    %1040 = vmatpush1.msra.mxu0 0.0
    %1041 = vmatprep.subr.mxu0 0.0
    %1042 = vmatpush1.msra.mxu0 0.0
    %1043 = vmatprep.subr.mxu0 0.0
    %1044 = vmatpush1.msra.mxu0 0.0
    %1045 = vmatprep.subr.mxu0 0.0
    %1046 = vmatpush1.msra.mxu0 0.0
    %1047 = vmatprep.subr.mxu0 0.0
    %1048 = vmatpush1.msra.mxu0 0.0
    %1049 = vmatprep.subr.mxu0 0.0
    %1050 = vmatpush1.msra.mxu0 0.0
    %1051 = vmatprep.subr.mxu0 0.0
    %1052 = vmatpush1.msra.mxu0 0.0
    %1053 = vmatprep.subr.mxu0 0.0
    %1054 = vmatpush1.msra.mxu0 0.0
    %1055 = vmatprep.subr.mxu0 0.0
    %1056 = vmatpush1.msra.mxu0 0.0
    %1057 = vmatprep.subr.mxu0 0.0
    %1058 = vmatpush1.msra.mxu0 0.0
    %1059 = vmatprep.subr.mxu0 0.0
    %1060 = vmatpush1.msra.mxu0 0.0
    %1061 = vmatprep.subr.mxu0 0.0
    %1062 = vmatpush1.msra.mxu0 0.0
    %1063 = vmatprep.subr.mxu0 0.0
    %1064 = vmatpush1.msra.mxu0 0.0
    %1065 = vmatprep.subr.mxu0 0.0
    %1066 = vmatpush1.msra.mxu0 0.0
    %1067 = vmatprep.subr.mxu0 0.0
    %1068 = vmatpush1.msra.mxu0 0.0
    %1069 = vmatprep.subr.mxu0 0.0
    %1070 = vmatpush1.msra.mxu0 0.0
    %1071 = vmatprep.subr.mxu0 0.0
    %1072 = vmatpush1.msra.mxu0 0.0
    %1073 = vmatprep.subr.mxu0 0.0
    %1074 = vmatpush1.msra.mxu0 0.0
    %1075 = vmatprep.subr.mxu0 0.0
    %1076 = vmatpush1.msra.mxu0 0.0
    %1077 = vmatprep.subr.mxu0 0.0
    %1078 = vmatpush1.msra.mxu0 0.0
    %1079 = vmatprep.subr.mxu0 0.0
    %1080 = vmatpush1.msra.mxu0 0.0
    %1081 = vmatprep.mubr.f32.mxu0 0.0
    %1082 = vmatmul.mubr.f32.gmra.mrb[0].mxu0 %v996
    %v1083 = vpop.f32.mrb[0].mxu0
    %v1084 = vadd.f32 0.0, %v1083
    %v1085 = vpop.f32.mrb[0].mxu0
    %1086 = vmatprep.mubr.f32.mxu0 0.0
    %1087 = vmatmul.mubr.f32.gmra.mrb[0].mxu0 %v999
    %v1088 = vpop.f32.mrb[0].mxu0
    %v1089 = vadd.f32 0.0, %v1088
    %v1090 = vpop.f32.mrb[0].mxu0
    %1091 = vmatprep.mubr.f32.mxu0 0.0
    %1092 = vmatmul.mubr.f32.gmra.mrb[0].mxu0 %v1002
    %v1093 = vpop.f32.mrb[0].mxu0
    %v1094 = vadd.f32 0.0, %v1093
    %v1095 = vpop.f32.mrb[0].mxu0
    %1096 = vmatprep.mubr.f32.mxu0 0.0
    %1097 = vmatmul.mubr.f32.gmra.mrb[0].mxu0 %v1005
    %v1098 = vpop.f32.mrb[0].mxu0
    %v1099 = vadd.f32 0.0, %v1098
    %v1100 = vpop.f32.mrb[0].mxu0
    %1101 = vmatprep.mubr.f32.mxu0 0.0
    %1102 = vmatmul.mubr.f32.gmra.mrb[0].mxu0 %v1008
    %v1103 = vpop.f32.mrb[0].mxu0
    %v1104 = vadd.f32 0.0, %v1103
    %v1105 = vpop.f32.mrb[0].mxu0
    %1106 = vmatprep.mubr.f32.mxu0 0.0
    %1107 = vmatmul.mubr.f32.gmra.mrb[0].mxu0 %v1011
    %v1108 = vpop.f32.mrb[0].mxu0
    %v1109 = vadd.f32 0.0, %v1108
    %v1110 = vpop.f32.mrb[0].mxu0
    %1111 = vdwg.mxu0
    %v1112 = vxor.u32 %v1084, 2147483648
    %v1113 = vxor.u32 %v1089, 2147483648
    %v1114 = vxor.u32 %v1094, 2147483648
    %v1115 = vxor.u32 %v1099, 2147483648
    %v1116 = vxor.u32 %v1104, 2147483648
    %v1117 = vxor.u32 %v1109, 2147483648
    %v1118 = vmul.f32 %v1112, 1.442695
    %v1119 = vpow.pop %v1118
    %v1120 = vmul.f32 %v1113, 1.442695
    %v1121 = vpow.pop %v1120
    %v1122 = vmul.f32 %v1114, 1.442695
    %v1123 = vpow.pop %v1122
    %v1124 = vmul.f32 %v1115, 1.442695
    %v1125 = vpow.pop %v1124
    %v1126 = vmul.f32 %v1116, 1.442695
    %v1127 = vpow.pop %v1126
    %v1128 = vmul.f32 %v1117, 1.442695
    %v1129 = vpow.pop %v1128
    %v1130 = vadd.f32 %v1119, 1.0
    %v1131 = vadd.f32 %v1121, 1.0
    %v1132 = vadd.f32 %v1123, 1.0
    %v1133 = vadd.f32 %v1125, 1.0
    %v1134 = vadd.f32 %v1127, 1.0
    %v1135 = vadd.f32 %v1129, 1.0
    %v1136 = vrcp.pop %v1130
    %v1137 = vmul.f32 1.0, %v1136
    %v1138 = vrcp.pop %v1131
    %v1139 = vmul.f32 1.0, %v1138
    %v1140 = vrcp.pop %v1132
    %v1141 = vmul.f32 1.0, %v1140
    %v1142 = vrcp.pop %v1133
    %v1143 = vmul.f32 1.0, %v1142
    %v1144 = vrcp.pop %v1134
    %v1145 = vmul.f32 1.0, %v1144
    %v1146 = vrcp.pop %v1135
    %v1147 = vmul.f32 1.0, %v1146
    %s1148 = sld [smem:[#allocation14]]
    %v1149 = vstv %s1148
    %v1150 = vmul.f32 %v1137, %v1149
    %s1151 = sld [smem:[#allocation14 + $0x1]]
    %v1152 = vstv %s1151
    %v1153 = vmul.f32 %v1139, %v1152
    %v1154 = vadd.f32 %v1150, %v1153
    %s1155 = sld [smem:[#allocation14 + $0x2]]
    %v1156 = vstv %s1155
    %v1157 = vmul.f32 %v1141, %v1156
    %v1158 = vadd.f32 %v1154, %v1157
    %s1159 = sld [smem:[#allocation14 + $0x3]]
    %v1160 = vstv %s1159
    %v1161 = vmul.f32 %v1143, %v1160
    %v1162 = vadd.f32 %v1158, %v1161
    %s1163 = sld [smem:[#allocation14 + $0x4]]
    %v1164 = vstv %s1163
    %v1165 = vmul.f32 %v1145, %v1164
    %v1166 = vadd.f32 %v1162, %v1165
    %s1167 = sld [smem:[#allocation14 + $0x5]]
    %v1168 = vstv %s1167
    %v1169 = vmul.f32 %v1147, %v1168
    %v1170 = vadd.f32 %v1166, %v1169
    %s1171 = sld [smem:[#allocation15]]
    %v1172 = vstv %s1171
    %v1173 = vadd.f32 %v1170, %v1172
    %s1174 = sld [smem:[#allocation14 + $0x80]]
    %v1175 = vstv %s1174
    %v1176 = vmul.f32 %v1137, %v1175
    %s1177 = sld [smem:[#allocation14 + $0x81]]
    %v1178 = vstv %s1177
    %v1179 = vmul.f32 %v1139, %v1178
    %v1180 = vadd.f32 %v1176, %v1179
    %s1181 = sld [smem:[#allocation14 + $0x82]]
    %v1182 = vstv %s1181
    %v1183 = vmul.f32 %v1141, %v1182
    %v1184 = vadd.f32 %v1180, %v1183
    %s1185 = sld [smem:[#allocation14 + $0x83]]
    %v1186 = vstv %s1185
    %v1187 = vmul.f32 %v1143, %v1186
    %v1188 = vadd.f32 %v1184, %v1187
    %s1189 = sld [smem:[#allocation14 + $0x84]]
    %v1190 = vstv %s1189
    %v1191 = vmul.f32 %v1145, %v1190
    %v1192 = vadd.f32 %v1188, %v1191
    %s1193 = sld [smem:[#allocation14 + $0x85]]
    %v1194 = vstv %s1193
    %v1195 = vmul.f32 %v1147, %v1194
    %v1196 = vadd.f32 %v1192, %v1195
    %s1197 = sld [smem:[#allocation15 + $0x1]]
    %v1198 = vstv %s1197
    %v1199 = vadd.f32 %v1196, %v1198
    %s1200 = sld [smem:[#allocation14 + $0x100]]
    %v1201 = vstv %s1200
    %v1202 = vmul.f32 %v1137, %v1201
    %s1203 = sld [smem:[#allocation14 + $0x101]]
    %v1204 = vstv %s1203
    %v1205 = vmul.f32 %v1139, %v1204
    %v1206 = vadd.f32 %v1202, %v1205
    %s1207 = sld [smem:[#allocation14 + $0x102]]
    %v1208 = vstv %s1207
    %v1209 = vmul.f32 %v1141, %v1208
    %v1210 = vadd.f32 %v1206, %v1209
    %s1211 = sld [smem:[#allocation14 + $0x103]]
    %v1212 = vstv %s1211
    %v1213 = vmul.f32 %v1143, %v1212
    %v1214 = vadd.f32 %v1210, %v1213
    %s1215 = sld [smem:[#allocation14 + $0x104]]
    %v1216 = vstv %s1215
    %v1217 = vmul.f32 %v1145, %v1216
    %v1218 = vadd.f32 %v1214, %v1217
    %s1219 = sld [smem:[#allocation14 + $0x105]]
    %v1220 = vstv %s1219
    %v1221 = vmul.f32 %v1147, %v1220
    %v1222 = vadd.f32 %v1218, %v1221
    %s1223 = sld [smem:[#allocation15 + $0x2]]
    %v1224 = vstv %s1223
    %v1225 = vadd.f32 %v1222, %v1224
    %s1226 = sld [smem:[#allocation14 + $0x180]]
    %v1227 = vstv %s1226
    %v1228 = vmul.f32 %v1137, %v1227
    %s1229 = sld [smem:[#allocation14 + $0x181]]
    %v1230 = vstv %s1229
    %v1231 = vmul.f32 %v1139, %v1230
    %v1232 = vadd.f32 %v1228, %v1231
    %s1233 = sld [smem:[#allocation14 + $0x182]]
    %v1234 = vstv %s1233
    %v1235 = vmul.f32 %v1141, %v1234
    %v1236 = vadd.f32 %v1232, %v1235
    %s1237 = sld [smem:[#allocation14 + $0x183]]
    %v1238 = vstv %s1237
    %v1239 = vmul.f32 %v1143, %v1238
    %v1240 = vadd.f32 %v1236, %v1239
    %s1241 = sld [smem:[#allocation14 + $0x184]]
    %v1242 = vstv %s1241
    %v1243 = vmul.f32 %v1145, %v1242
    %v1244 = vadd.f32 %v1240, %v1243
    %s1245 = sld [smem:[#allocation14 + $0x185]]
    %v1246 = vstv %s1245
    %v1247 = vmul.f32 %v1147, %v1246
    %v1248 = vadd.f32 %v1244, %v1247
    %s1249 = sld [smem:[#allocation15 + $0x3]]
    %v1250 = vstv %s1249
    %v1251 = vadd.f32 %v1248, %v1250
    %s1252 = sld [smem:[#allocation14 + $0x200]]
    %v1253 = vstv %s1252
    %v1254 = vmul.f32 %v1137, %v1253
    %s1255 = sld [smem:[#allocation14 + $0x201]]
    %v1256 = vstv %s1255
    %v1257 = vmul.f32 %v1139, %v1256
    %v1258 = vadd.f32 %v1254, %v1257
    %s1259 = sld [smem:[#allocation14 + $0x202]]
    %v1260 = vstv %s1259
    %v1261 = vmul.f32 %v1141, %v1260
    %v1262 = vadd.f32 %v1258, %v1261
    %s1263 = sld [smem:[#allocation14 + $0x203]]
    %v1264 = vstv %s1263
    %v1265 = vmul.f32 %v1143, %v1264
    %v1266 = vadd.f32 %v1262, %v1265
    %s1267 = sld [smem:[#allocation14 + $0x204]]
    %v1268 = vstv %s1267
    %v1269 = vmul.f32 %v1145, %v1268
    %v1270 = vadd.f32 %v1266, %v1269
    %s1271 = sld [smem:[#allocation14 + $0x205]]
    %v1272 = vstv %s1271
    %v1273 = vmul.f32 %v1147, %v1272
    %v1274 = vadd.f32 %v1270, %v1273
    %s1275 = sld [smem:[#allocation15 + $0x4]]
    %v1276 = vstv %s1275
    %v1277 = vadd.f32 %v1274, %v1276
    %s1278 = sld [smem:[#allocation14 + $0x280]]
    %v1279 = vstv %s1278
    %v1280 = vmul.f32 %v1137, %v1279
    %s1281 = sld [smem:[#allocation14 + $0x281]]
    %v1282 = vstv %s1281
    %v1283 = vmul.f32 %v1139, %v1282
    %v1284 = vadd.f32 %v1280, %v1283
    %s1285 = sld [smem:[#allocation14 + $0x282]]
    %v1286 = vstv %s1285
    %v1287 = vmul.f32 %v1141, %v1286
    %v1288 = vadd.f32 %v1284, %v1287
    %s1289 = sld [smem:[#allocation14 + $0x283]]
    %v1290 = vstv %s1289
    %v1291 = vmul.f32 %v1143, %v1290
    %v1292 = vadd.f32 %v1288, %v1291
    %s1293 = sld [smem:[#allocation14 + $0x284]]
    %v1294 = vstv %s1293
    %v1295 = vmul.f32 %v1145, %v1294
    %v1296 = vadd.f32 %v1292, %v1295
    %s1297 = sld [smem:[#allocation14 + $0x285]]
    %v1298 = vstv %s1297
    %v1299 = vmul.f32 %v1147, %v1298
    %v1300 = vadd.f32 %v1296, %v1299
    %s1301 = sld [smem:[#allocation15 + $0x5]]
    %v1302 = vstv %s1301
    %v1303 = vadd.f32 %v1300, %v1302
    %v1304 = vld [vmem:[%s4] sm:$0xff]
    %v1305 = vld [vmem:[%s4 + $0x8] sm:$0xff]
    %v1307 = vsel %vm162, %v1173, 0
    %v1310 = vsel %vm162, %v1199, 0
    %v1313 = vsel %vm162, %v1225, 0
    %v1316 = vsel %vm162, %v1251, 0
    %v1319 = vsel %vm162, %v1277, 0
    %v1322 = vsel %vm162, %v1303, 0
    %1324 = vmatprep.subr.mxu0 0.0
    %1325 = vmatpush1.msra.mxu0 %v1304
    %1326 = vmatprep.subr.mxu0 0.0
    %1327 = vmatpush1.msra.mxu0 %v1305
    %1328 = vmatprep.subr.mxu0 0.0
    %1329 = vmatpush1.msra.mxu0 0.0
    %1330 = vmatprep.subr.mxu0 0.0
    %1331 = vmatpush1.msra.mxu0 0.0
    %1332 = vmatprep.subr.mxu0 0.0
    %1333 = vmatpush1.msra.mxu0 0.0
    %1334 = vmatprep.subr.mxu0 0.0
    %1335 = vmatpush1.msra.mxu0 0.0
    %1336 = vmatprep.subr.mxu0 0.0
    %1337 = vmatpush1.msra.mxu0 0.0
    %1338 = vmatprep.subr.mxu0 0.0
    %1339 = vmatpush1.msra.mxu0 0.0
    %1340 = vmatprep.subr.mxu0 0.0
    %1341 = vmatpush1.msra.mxu0 0.0
    %1342 = vmatprep.subr.mxu0 0.0
    %1343 = vmatpush1.msra.mxu0 0.0
    %1344 = vmatprep.subr.mxu0 0.0
    %1345 = vmatpush1.msra.mxu0 0.0
    %1346 = vmatprep.subr.mxu0 0.0
    %1347 = vmatpush1.msra.mxu0 0.0
    %1348 = vmatprep.subr.mxu0 0.0
    %1349 = vmatpush1.msra.mxu0 0.0
    %1350 = vmatprep.subr.mxu0 0.0
    %1351 = vmatpush1.msra.mxu0 0.0
    %1352 = vmatprep.subr.mxu0 0.0
    %1353 = vmatpush1.msra.mxu0 0.0
    %1354 = vmatprep.subr.mxu0 0.0
    %1355 = vmatpush1.msra.mxu0 0.0
    %1356 = vmatprep.subr.mxu0 0.0
    %1357 = vmatpush1.msra.mxu0 0.0
    %1358 = vmatprep.subr.mxu0 0.0
    %1359 = vmatpush1.msra.mxu0 0.0
    %1360 = vmatprep.subr.mxu0 0.0
    %1361 = vmatpush1.msra.mxu0 0.0
    %1362 = vmatprep.subr.mxu0 0.0
    %1363 = vmatpush1.msra.mxu0 0.0
    %1364 = vmatprep.subr.mxu0 0.0
    %1365 = vmatpush1.msra.mxu0 0.0
    %1366 = vmatprep.subr.mxu0 0.0
    %1367 = vmatpush1.msra.mxu0 0.0
    %1368 = vmatprep.subr.mxu0 0.0
    %1369 = vmatpush1.msra.mxu0 0.0
    %1370 = vmatprep.subr.mxu0 0.0
    %1371 = vmatpush1.msra.mxu0 0.0
    %1372 = vmatprep.subr.mxu0 0.0
    %1373 = vmatpush1.msra.mxu0 0.0
    %1374 = vmatprep.subr.mxu0 0.0
    %1375 = vmatpush1.msra.mxu0 0.0
    %1376 = vmatprep.subr.mxu0 0.0
    %1377 = vmatpush1.msra.mxu0 0.0
    %1378 = vmatprep.subr.mxu0 0.0
    %1379 = vmatpush1.msra.mxu0 0.0
    %1380 = vmatprep.subr.mxu0 0.0
    %1381 = vmatpush1.msra.mxu0 0.0
    %1382 = vmatprep.subr.mxu0 0.0
    %1383 = vmatpush1.msra.mxu0 0.0
    %1384 = vmatprep.subr.mxu0 0.0
    %1385 = vmatpush1.msra.mxu0 0.0
    %1386 = vmatprep.subr.mxu0 0.0
    %1387 = vmatpush1.msra.mxu0 0.0
    %1388 = vmatprep.mubr.f32.mxu0 0.0
    %1389 = vmatmul.mubr.f32.gmra.mrb[0].mxu0 %v1307
    %v1390 = vpop.f32.mrb[0].mxu0
    %v1391 = vadd.f32 0.0, %v1390
    %v1392 = vpop.f32.mrb[0].mxu0
    %1393 = vmatprep.mubr.f32.mxu0 0.0
    %1394 = vmatmul.mubr.f32.gmra.mrb[0].mxu0 %v1310
    %v1395 = vpop.f32.mrb[0].mxu0
    %v1396 = vadd.f32 0.0, %v1395
    %v1397 = vpop.f32.mrb[0].mxu0
    %1398 = vmatprep.mubr.f32.mxu0 0.0
    %1399 = vmatmul.mubr.f32.gmra.mrb[0].mxu0 %v1313
    %v1400 = vpop.f32.mrb[0].mxu0
    %v1401 = vadd.f32 0.0, %v1400
    %v1402 = vpop.f32.mrb[0].mxu0
    %1403 = vmatprep.mubr.f32.mxu0 0.0
    %1404 = vmatmul.mubr.f32.gmra.mrb[0].mxu0 %v1316
    %v1405 = vpop.f32.mrb[0].mxu0
    %v1406 = vadd.f32 0.0, %v1405
    %v1407 = vpop.f32.mrb[0].mxu0
    %1408 = vmatprep.mubr.f32.mxu0 0.0
    %1409 = vmatmul.mubr.f32.gmra.mrb[0].mxu0 %v1319
    %v1410 = vpop.f32.mrb[0].mxu0
    %v1411 = vadd.f32 0.0, %v1410
    %v1412 = vpop.f32.mrb[0].mxu0
    %1413 = vmatprep.mubr.f32.mxu0 0.0
    %1414 = vmatmul.mubr.f32.gmra.mrb[0].mxu0 %v1322
    %v1415 = vpop.f32.mrb[0].mxu0
    %v1416 = vadd.f32 0.0, %v1415
    %v1417 = vpop.f32.mrb[0].mxu0
    %1418 = vdwg.mxu0
    %v1419 = vxor.u32 %v1391, 2147483648
    %v1420 = vxor.u32 %v1396, 2147483648
    %v1421 = vxor.u32 %v1401, 2147483648
    %v1422 = vxor.u32 %v1406, 2147483648
    %v1423 = vxor.u32 %v1411, 2147483648
    %v1424 = vxor.u32 %v1416, 2147483648
    %v1425 = vmul.f32 %v1419, 1.442695
    %v1426 = vpow.pop %v1425
    %v1427 = vmul.f32 %v1420, 1.442695
    %v1428 = vpow.pop %v1427
    %v1429 = vmul.f32 %v1421, 1.442695
    %v1430 = vpow.pop %v1429
    %v1431 = vmul.f32 %v1422, 1.442695
    %v1432 = vpow.pop %v1431
    %v1433 = vmul.f32 %v1423, 1.442695
    %v1434 = vpow.pop %v1433
    %v1435 = vmul.f32 %v1424, 1.442695
    %v1436 = vpow.pop %v1435
    %v1437 = vadd.f32 %v1426, 1.0
    %v1438 = vadd.f32 %v1428, 1.0
    %v1439 = vadd.f32 %v1430, 1.0
    %v1440 = vadd.f32 %v1432, 1.0
    %v1441 = vadd.f32 %v1434, 1.0
    %v1442 = vadd.f32 %v1436, 1.0
    %v1443 = vrcp.pop %v1437
    %v1444 = vmul.f32 1.0, %v1443
    %v1445 = vrcp.pop %v1438
    %v1446 = vmul.f32 1.0, %v1445
    %v1447 = vrcp.pop %v1439
    %v1448 = vmul.f32 1.0, %v1447
    %v1449 = vrcp.pop %v1440
    %v1450 = vmul.f32 1.0, %v1449
    %v1451 = vrcp.pop %v1441
    %v1452 = vmul.f32 1.0, %v1451
    %v1453 = vrcp.pop %v1442
    %v1454 = vmul.f32 1.0, %v1453
    %s1455 = sld [smem:[#allocation17]]
    %v1456 = vstv %s1455
    %v1457 = vmul.f32 %v1444, %v1456
    %s1458 = sld [smem:[#allocation17 + $0x1]]
    %v1459 = vstv %s1458
    %v1460 = vmul.f32 %v1446, %v1459
    %v1461 = vadd.f32 %v1457, %v1460
    %s1462 = sld [smem:[#allocation17 + $0x2]]
    %v1463 = vstv %s1462
    %v1464 = vmul.f32 %v1448, %v1463
    %v1465 = vadd.f32 %v1461, %v1464
    %s1466 = sld [smem:[#allocation17 + $0x3]]
    %v1467 = vstv %s1466
    %v1468 = vmul.f32 %v1450, %v1467
    %v1469 = vadd.f32 %v1465, %v1468
    %s1470 = sld [smem:[#allocation17 + $0x4]]
    %v1471 = vstv %s1470
    %v1472 = vmul.f32 %v1452, %v1471
    %v1473 = vadd.f32 %v1469, %v1472
    %s1474 = sld [smem:[#allocation17 + $0x5]]
    %v1475 = vstv %s1474
    %v1476 = vmul.f32 %v1454, %v1475
    %v1477 = vadd.f32 %v1473, %v1476
    %s1478 = sld [smem:[#allocation2]]
    %v1479 = vstv %s1478
    %v1480 = vadd.f32 %v1477, %v1479
    %v1481 = vld [vmem:[#allocation9] sm:$0xff]
    %v1482 = vld [vmem:[#allocation9 + $0x8] sm:$0xff]
    %v1483 = vld [vmem:[#allocation9 + $0x10] sm:$0xff]
    %v1484 = vld [vmem:[#allocation9 + $0x18] sm:$0xff]
    %v1485 = vld [vmem:[#allocation9 + $0x20] sm:$0xff]
    %v1486 = vld [vmem:[#allocation9 + $0x28] sm:$0xff]
    %v1487 = vld [vmem:[#allocation9 + $0x30] sm:$0xff]
    %v1488 = vld [vmem:[#allocation9 + $0x38] sm:$0xff]
    %v1489 = vld [vmem:[#allocation9 + $0x40] sm:$0xff]
    %v1490 = vld [vmem:[#allocation9 + $0x48] sm:$0xff]
    %v1491 = vld [vmem:[#allocation9 + $0x50] sm:$0xff]
    %v1492 = vld [vmem:[#allocation9 + $0x58] sm:$0xff]
    %v1493 = vld [vmem:[#allocation9 + $0x60] sm:$0xff]
    %v1494 = vld [vmem:[#allocation9 + $0x68] sm:$0xff]
    %v1495 = vld [vmem:[#allocation9 + $0x70] sm:$0xff]
    %v1496 = vld [vmem:[#allocation9 + $0x78] sm:$0xff]
    %vm1497 = vcmask 523264
    %v1499 = vsel %vm1497, %v1480, 0
    %1501 = vmatprep.subr.mxu0 %v1482
    %1502 = vmatpush1.msra.mxu0 %v1481
    %1503 = vmatprep.subr.mxu0 %v1484
    %1504 = vmatpush1.msra.mxu0 %v1483
    %1505 = vmatprep.subr.mxu0 %v1486
    %1506 = vmatpush1.msra.mxu0 %v1485
    %1507 = vmatprep.subr.mxu0 %v1488
    %1508 = vmatpush1.msra.mxu0 %v1487
    %1509 = vmatprep.subr.mxu0 %v1490
    %1510 = vmatpush1.msra.mxu0 %v1489
    %1511 = vmatprep.subr.mxu0 %v1492
    %1512 = vmatpush1.msra.mxu0 %v1491
    %1513 = vmatprep.subr.mxu0 %v1494
    %1514 = vmatpush1.msra.mxu0 %v1493
    %1515 = vmatprep.subr.mxu0 %v1496
    %1516 = vmatpush1.msra.mxu0 %v1495
    %1517 = vmatprep.subr.mxu0 0.0
    %1518 = vmatpush1.msra.mxu0 0.0
    %1519 = vmatprep.subr.mxu0 0.0
    %1520 = vmatpush1.msra.mxu0 0.0
    %1521 = vmatprep.subr.mxu0 0.0
    %1522 = vmatpush1.msra.mxu0 0.0
    %1523 = vmatprep.subr.mxu0 0.0
    %1524 = vmatpush1.msra.mxu0 0.0
    %1525 = vmatprep.subr.mxu0 0.0
    %1526 = vmatpush1.msra.mxu0 0.0
    %1527 = vmatprep.subr.mxu0 0.0
    %1528 = vmatpush1.msra.mxu0 0.0
    %1529 = vmatprep.subr.mxu0 0.0
    %1530 = vmatpush1.msra.mxu0 0.0
    %1531 = vmatprep.subr.mxu0 0.0
    %1532 = vmatpush1.msra.mxu0 0.0
    %1533 = vmatprep.subr.mxu0 0.0
    %1534 = vmatpush1.msra.mxu0 0.0
    %1535 = vmatprep.subr.mxu0 0.0
    %1536 = vmatpush1.msra.mxu0 0.0
    %1537 = vmatprep.subr.mxu0 0.0
    %1538 = vmatpush1.msra.mxu0 0.0
    %1539 = vmatprep.subr.mxu0 0.0
    %1540 = vmatpush1.msra.mxu0 0.0
    %1541 = vmatprep.subr.mxu0 0.0
    %1542 = vmatpush1.msra.mxu0 0.0
    %1543 = vmatprep.subr.mxu0 0.0
    %1544 = vmatpush1.msra.mxu0 0.0
    %1545 = vmatprep.subr.mxu0 0.0
    %1546 = vmatpush1.msra.mxu0 0.0
    %1547 = vmatprep.subr.mxu0 0.0
    %1548 = vmatpush1.msra.mxu0 0.0
    %1549 = vmatprep.subr.mxu0 0.0
    %1550 = vmatpush1.msra.mxu0 0.0
    %1551 = vmatprep.subr.mxu0 0.0
    %1552 = vmatpush1.msra.mxu0 0.0
    %1553 = vmatprep.subr.mxu0 0.0
    %1554 = vmatpush1.msra.mxu0 0.0
    %1555 = vmatprep.subr.mxu0 0.0
    %1556 = vmatpush1.msra.mxu0 0.0
    %1557 = vmatprep.subr.mxu0 0.0
    %1558 = vmatpush1.msra.mxu0 0.0
    %1559 = vmatprep.subr.mxu0 0.0
    %1560 = vmatpush1.msra.mxu0 0.0
    %1561 = vmatprep.subr.mxu0 0.0
    %1562 = vmatpush1.msra.mxu0 0.0
    %1563 = vmatprep.subr.mxu0 0.0
    %1564 = vmatpush1.msra.mxu0 0.0
    %1565 = vmatprep.mubr.f32.mxu0 0.0
    %1566 = vmatmul.mubr.f32.gmra.mrb[0].mxu0 %v1499
    %v1567 = vpop.f32.mrb[0].mxu0
    %v1568 = vadd.f32 0.0, %v1567
    %v1569 = vpop.f32.mrb[0].mxu0
    %v1570 = vadd.f32 0.0, %v1569
    %1571 = vdwg.mxu0
    %v1572 = vxor.u32 %v1568, 2147483648
    %v1573 = vxor.u32 %v1570, 2147483648
    %v1574 = vmul.f32 %v1572, 1.442695
    %v1575 = vpow.pop %v1574
    %v1576 = vmul.f32 %v1573, 1.442695
    %v1577 = vpow.pop %v1576
    %v1578 = vadd.f32 %v1575, 1.0
    %v1579 = vadd.f32 %v1577, 1.0
    %v1580 = vrcp.pop %v1578
    %v1581 = vmul.f32 1.0, %v1580
    %v1582 = vrcp.pop %v1579
    %v1583 = vmul.f32 1.0, %v1582
    %v1584 = vmul.f32 %v1581, 255.0
    %v1585 = vmul.f32 %v1583, 255.0
    %v1588 = vcombine.low %v1584, %v1585
    %v1589 = vcombine.high %v1584, %v1585
    %v1591 = vunpack.c.l.s4 1966171168
    %v1592 = vunpack.c.0.s8 %v1591
    %v1593 = vlaneseq
    %v1594 = vshrl.u32 %v1593, 7
    %v1595 = vsub.s32 %v1592, %v1594
    %v1596 = vrot.slane %v1588, %v1595
    %v1598 = vunpack.c.l.s4 1966171168
    %v1599 = vunpack.c.0.s8 %v1598
    %v1600 = vlaneseq
    %v1601 = vshrl.u32 %v1600, 7
    %v1602 = vsub.s32 %v1599, %v1601
    %v1603 = vrot.slane %v1589, %v1602
    %v1604 = vcombine.high %v1596, %v1596
    %v1605 = vcombine.high %v1603, %v1603
    %v1607 = vunpack.c.l.s4 1966171168
    %v1608 = vunpack.c.0.s8 %v1607
    %v1609 = vlaneseq
    %v1610 = vshrl.u32 %v1609, 7
    %v1611 = vsub.s32 %v1608, %v1610
    %v1612 = vrot.slane %v1596, %v1611
    %v1614 = vunpack.c.l.s4 1966171168
    %v1615 = vunpack.c.0.s8 %v1614
    %v1616 = vlaneseq
    %v1617 = vshrl.u32 %v1616, 7
    %v1618 = vsub.s32 %v1615, %v1617
    %v1619 = vrot.slane %v1603, %v1618
    %v1621 = vunpack.c.l.s4 1966171168
    %v1622 = vunpack.c.0.s8 %v1621
    %v1623 = vlaneseq
    %v1624 = vshrl.u32 %v1623, 7
    %v1625 = vsub.s32 %v1622, %v1624
    %v1626 = vrot.slane %v1604, %v1625
    %v1628 = vunpack.c.l.s4 1966171168
    %v1629 = vunpack.c.0.s8 %v1628
    %v1630 = vlaneseq
    %v1631 = vshrl.u32 %v1630, 7
    %v1632 = vsub.s32 %v1629, %v1631
    %v1633 = vrot.slane %v1605, %v1632
    %v1634 = vcombine.high %v1612, %v1612
    %v1635 = vcombine.high %v1619, %v1619
    %v1636 = vcombine.high %v1626, %v1626
    %v1637 = vcombine.high %v1633, %v1633
    %v1646 = vlaneseq
    %vm1647 = vcmp.ge.s32.totalorder %v1646, 0
    %vm1648 = vcmp.lt.s32.totalorder %v1646, 256
    %vm1649 = vmand %vm1647, %vm1648
    %1650 = vst.msk [vmem:[%s12] sm:$0x3] %vm1649, %v1612
    %1651 = vst.msk [vmem:[%s12 + $0x2] sm:$0x3] %vm1649, %v1626
    %1652 = vst.msk [vmem:[%s12 + $0x4] sm:$0x3] %vm1649, %v1634
    %1653 = vst.msk [vmem:[%s12 + $0x6] sm:$0x3] %vm1649, %v1636
    %1654 = vst.msk [vmem:[%s12 + $0x8] sm:$0x3] %vm1649, %v1619
    %1655 = vst.msk [vmem:[%s12 + $0xa] sm:$0x3] %vm1649, %v1633
    %1656 = vst.msk [vmem:[%s12 + $0xc] sm:$0x3] %vm1649, %v1635
    %1657 = vst.msk [vmem:[%s12 + $0xe] sm:$0x3] %vm1649, %v1637
    // Predicated region
    $region86: #{apply.1} parent=1 // pred_check
      _
    $region87: #{apply.1} parent=1 // pred_check_branch
      %1659 = sbr.rel (0) target = $region89
    $region88: #{apply.1} parent=1 // pred_region
      _
    $region89: #{apply.1} parent=1 // pred_fallthru
      _
    // Predicated region
    $region90: #{apply.1} parent=1 // pred_check
      _
    $region91: #{apply.1} parent=1 // pred_check_branch
      %1661 = sbr.rel (0) target = $region93
    $region92: #{apply.1} parent=1 // pred_region
      _
    $region93: #{apply.1} parent=1 // pred_fallthru
      _
    %1662 = vsyncpa [#allocation4], 1
    %1663 = vsyncpa [#allocation7], 1
    %1664 = vsyncpa [#allocation10], 1
    %1665 = vsyncpa [#allocation5], 1
    %1666 = vsyncpa [#allocation13], 1
    %1667 = vsyncpa [#allocation16], 1

</llo_original>
